<compile_context>
chip_gen: v5e
topology: v5e:2x2
jax: 0.10.0
libtpu: 0.0.40
codegen_flags: <defaults>
</compile_context>

<pallas_src>
import functools

import jax
import jax.numpy as jnp
from jax import lax
from jax.experimental import pallas as pl
from jax.experimental.pallas import tpu as pltpu

D_IN, D_H1, D_H2 = 31, 20, 10   # fc1: 31->20, fc2: 20->10, fc3: 10->20, fc4: 20->31
D_PAD = 32                      # hidden feature dims zero-padded to 32 (multiple of 8)
N_LAYERS = 4
TM_DEFAULT = 4096               # review: 4096-8192; 4096 keeps v5e's 16 MiB scoped VMEM safe


def _round_up(n, m):
    return ((n + m - 1) // m) * m


def _choose_tile(batch, tm):
    """Batch tile: multiple of 128 (guarded), capped so the grid has >=2 steps
    (v7x megacore) whenever the batch allows it."""
    tm = max(128, _round_up(tm, 128))
    half = max(128, _round_up(-(-batch // 2), 128))
    return min(tm, half)


# ---------------------------------------------------------------------------
# Primary kernel: natural [tm, 31] I/O blocks, feature-major compute inside.
# ---------------------------------------------------------------------------
def _fused_kernel(x_ref, w1_ref, b1_ref, w2_ref, b2_ref, w3_ref, b3_ref,
                  w4_ref, b4_ref, o_ref):
    """x_ref/o_ref: [tm, 31] (batch on sublanes).  Weights are W^T zero-padded
    on the hidden dims; biases are f32.  All accumulation in f32."""
    io_dtype = x_ref.dtype
    x = x_ref[...]                                            # [tm, 31]

    # Layer 1: contract both minor dims (the q @ k.T pattern) so the result is
    # already feature-major [32, tm] -- the layout change rides the MXU/XLU.
    h = lax.dot_general(w1_ref[...], x, (((1,), (1,)), ((), ())),
                        preferred_element_type=jnp.float32)   # [32, tm]
    h = jnp.maximum(h + b1_ref[...], 0.0).astype(io_dtype)

    # Layers 2-3: plain feature-major matmuls with resident 32x32 weights.
    h = jnp.maximum(jnp.dot(w2_ref[...], h, preferred_element_type=jnp.float32)
                    + b2_ref[...], 0.0).astype(io_dtype)
    h = jnp.maximum(jnp.dot(w3_ref[...], h, preferred_element_type=jnp.float32)
                    + b3_ref[...], 0.0).astype(io_dtype)

    # Layer 4: contract both major dims (A^T @ B pattern) to come back to the
    # natural batch-major layout [tm, 31] for a dense, slice-free store.
    out = lax.dot_general(h, w4_ref[...], (((0,), (0,)), ((), ())),
                          preferred_element_type=jnp.float32)  # [tm, 31]
    out = jnp.maximum(out + b4_ref[...], 0.0)
    o_ref[...] = out.astype(o_ref.dtype)


def pack_params_fused(params, dtype=jnp.float32):
    """Pack weights as transposed / padded blocks for the fused kernel."""
    w1t = jnp.zeros((D_PAD, D_IN), dtype).at[:D_H1, :].set(params["w1"].T.astype(dtype))
    b1 = jnp.zeros((D_PAD, 1), jnp.float32).at[:D_H1, 0].set(params["b1"])
    w2t = jnp.zeros((D_PAD, D_PAD), dtype).at[:D_H2, :D_H1].set(params["w2"].T.astype(dtype))
    b2 = jnp.zeros((D_PAD, 1), jnp.float32).at[:D_H2, 0].set(params["b2"])
    w3t = jnp.zeros((D_PAD, D_PAD), dtype).at[:D_H1, :D_H2].set(params["w3"].T.astype(dtype))
    b3 = jnp.zeros((D_PAD, 1), jnp.float32).at[:D_H1, 0].set(params["b3"])
    w4p = jnp.zeros((D_PAD, D_IN), dtype).at[:D_H1, :].set(params["w4"].astype(dtype))
    b4r = params["b4"].reshape(1, D_IN).astype(jnp.float32)
    return (w1t, b1, w2t, b2, w3t, b3, w4p, b4r)


@functools.partial(jax.jit, static_argnames=("tm",))
def denoise_forward_fused(x, packed, *, tm=TM_DEFAULT):
    """x: [B, 31].  No wrapper transposes; batch is padded only if B % tile != 0."""
    B = x.shape[0]
    tm_eff = _choose_tile(B, tm)
    B_pad = _round_up(B, tm_eff)
    if B_pad != B:
        x = jnp.pad(x, ((0, B_pad - B), (0, 0)))
    grid = (B_pad // tm_eff,)

    weight_specs = [pl.BlockSpec(p.shape, lambda i: (0, 0)) for p in packed]
    out = pl.pallas_call(
        _fused_kernel,
        out_shape=jax.ShapeDtypeStruct((B_pad, D_IN), x.dtype),
        grid_spec=pltpu.PrefetchScalarGridSpec(
            num_scalar_prefetch=0,
            grid=grid,
            in_specs=[pl.BlockSpec((tm_eff, D_IN), lambda i: (i, 0))] + weight_specs,
            out_specs=pl.BlockSpec((tm_eff, D_IN), lambda i: (i, 0)),
        ),
        compiler_params=pltpu.CompilerParams(
            dimension_semantics=("parallel",)),
    )(x, *packed)
    return out[:B] if B_pad != B else out


# ---------------------------------------------------------------------------
# Fallback kernel: feature-major [32, B] kernel I/O (previously validated).
# ---------------------------------------------------------------------------
def _feature_major_kernel(x_ref, w_ref, b_ref, o_ref):
    """x_ref/o_ref: [32, tm]; w_ref: [4, 32, 32] W^T padded; b_ref: [4, 32, 1]."""
    io_dtype = x_ref.dtype
    h = x_ref[...]
    for i in range(N_LAYERS):                                  # static unroll
        h = jnp.maximum(
            jnp.dot(w_ref[i], h, preferred_element_type=jnp.float32) + b_ref[i],
            0.0).astype(io_dtype)
    o_ref[...] = h.astype(o_ref.dtype)


def pack_params_feature_major(params, dtype=jnp.float32):
    w_pack = jnp.zeros((N_LAYERS, D_PAD, D_PAD), dtype)
    b_pack = jnp.zeros((N_LAYERS, D_PAD, 1), jnp.float32)
    for i in range(N_LAYERS):
        w = params[f"w{i + 1}"]                                # [in, out]
        b = params[f"b{i + 1}"]                                # [out]
        in_d, out_d = w.shape
        w_pack = w_pack.at[i, :out_d, :in_d].set(w.T.astype(dtype))
        b_pack = b_pack.at[i, :out_d, 0].set(b)
    return (w_pack, b_pack)


@functools.partial(jax.jit, static_argnames=("tm",))
def denoise_forward_feature_major(x, packed, *, tm=TM_DEFAULT):
    w_pack, b_pack = packed
    B = x.shape[0]
    tm_eff = _choose_tile(B, tm)
    B_pad = _round_up(B, tm_eff)
    grid = (B_pad // tm_eff,)
    xt = jnp.pad(x, ((0, B_pad - B), (0, D_PAD - D_IN))).T     # [32, B_pad]

    out_t = pl.pallas_call(
        _feature_major_kernel,
        out_shape=jax.ShapeDtypeStruct((D_PAD, B_pad), x.dtype),
        grid_spec=pltpu.PrefetchScalarGridSpec(
            num_scalar_prefetch=0,
            grid=grid,
            in_specs=[
                pl.BlockSpec((D_PAD, tm_eff), lambda i: (0, i)),
                pl.BlockSpec((N_LAYERS, D_PAD, D_PAD), lambda i: (0, 0, 0)),
                pl.BlockSpec((N_LAYERS, D_PAD, 1), lambda i: (0, 0, 0)),
            ],
            out_specs=pl.BlockSpec((D_PAD, tm_eff), lambda i: (0, i)),
        ),
        compiler_params=pltpu.CompilerParams(
            dimension_semantics=("parallel",)),
    )(xt, w_pack, b_pack)
    return out_t[:D_IN, :B].T


# ---------------------------------------------------------------------------
# Reference, init, driver.
# ---------------------------------------------------------------------------
def init_params(key):
    """nn.Linear-style U(-1/sqrt(fan_in), +1/sqrt(fan_in)) init; w stored [in, out]."""
    dims = [(D_IN, D_H1), (D_H1, D_H2), (D_H2, D_H1), (D_H1, D_IN)]
    params = {}
    for idx, (fan_in, fan_out) in enumerate(dims, start=1):
        key, kw, kb = jax.random.split(key, 3)
        bound = 1.0 / (fan_in ** 0.5)
        params[f"w{idx}"] = jax.random.uniform(kw, (fan_in, fan_out), jnp.float32, -bound, bound)
        params[f"b{idx}"] = jax.random.uniform(kb, (fan_out,), jnp.float32, -bound, bound)
    return params


def reference_forward(x, params):
    h = x
    for i in range(1, N_LAYERS + 1):
        h = jnp.maximum(h @ params[f"w{i}"] + params[f"b{i}"], 0.0)
    return h


def _close(out, ref, tol):
    return bool(jnp.allclose(out.astype(jnp.float32), ref, atol=tol, rtol=tol))


if __name__ == "__main__":
    key = jax.random.PRNGKey(0)
    key, kx = jax.random.split(key)
    params = init_params(key)

    batch = 1024                         # divides the tile -> zero wrapper pad/slice ops
    x = jax.random.normal(kx, (batch, D_IN), jnp.float32)
    ref = reference_forward(x, params)

    for dtype, tol in ((jnp.float32, 2e-4), (jnp.bfloat16, 5e-2)):
        xd = x.astype(dtype)
        try:
            packed = pack_params_fused(params, dtype)          # packed once, outside fwd
            out = jax.block_until_ready(denoise_forward_fused(xd, packed, tm=TM_DEFAULT))
            if not _close(out, ref, tol):
                raise ValueError("fused-path numerics mismatch")
        except Exception:
            # Fused natural-layout path unavailable on this toolchain -> use the
            # previously validated feature-major kernel (still large-tile + jit).
            packed = pack_params_feature_major(params, dtype)
            out = jax.block_until_ready(
                denoise_forward_feature_major(xd, packed, tm=TM_DEFAULT))
        assert out.shape == (batch, D_IN)
        assert _close(out, ref, tol), f"mismatch vs JAX reference ({dtype})"

    print("KERNEL_OK")
</pallas_src>

<mosaic_0001>
module attributes {stable_mosaic.version = 11 : i64} {
  func.func @_fused_kernel(%arg0: i32, %arg1: memref<512x31xf32, #tpu.memory_space<vmem>>, %arg2: memref<32x31xf32, #tpu.memory_space<vmem>>, %arg3: memref<32x1xf32, #tpu.memory_space<vmem>>, %arg4: memref<32x32xf32, #tpu.memory_space<vmem>>, %arg5: memref<32x1xf32, #tpu.memory_space<vmem>>, %arg6: memref<32x32xf32, #tpu.memory_space<vmem>>, %arg7: memref<32x1xf32, #tpu.memory_space<vmem>>, %arg8: memref<32x31xf32, #tpu.memory_space<vmem>>, %arg9: memref<1x31xf32, #tpu.memory_space<vmem>>, %arg10: memref<512x31xf32, #tpu.memory_space<vmem>>) attributes {dimension_semantics = [#tpu.dimension_semantics<parallel>], iteration_bounds = array<i64: 2>, scalar_prefetch = 0 : i64, scratch_operands = 0 : i64, tpu.core_type = #tpu.core_type<tc>, window_params = [{transform_indices = @transform_0, window_bounds = array<i64: 512, 31>}, {pipeline_mode = #tpu.pipeline_mode<synchronous>, transform_indices = @transform_1, window_bounds = array<i64: 32, 31>}, {pipeline_mode = #tpu.pipeline_mode<synchronous>, transform_indices = @transform_2, window_bounds = array<i64: 32, 1>}, {pipeline_mode = #tpu.pipeline_mode<synchronous>, transform_indices = @transform_3, window_bounds = array<i64: 32, 32>}, {pipeline_mode = #tpu.pipeline_mode<synchronous>, transform_indices = @transform_4, window_bounds = array<i64: 32, 1>}, {pipeline_mode = #tpu.pipeline_mode<synchronous>, transform_indices = @transform_5, window_bounds = array<i64: 32, 32>}, {pipeline_mode = #tpu.pipeline_mode<synchronous>, transform_indices = @transform_6, window_bounds = array<i64: 32, 1>}, {pipeline_mode = #tpu.pipeline_mode<synchronous>, transform_indices = @transform_7, window_bounds = array<i64: 32, 31>}, {pipeline_mode = #tpu.pipeline_mode<synchronous>, transform_indices = @transform_8, window_bounds = array<i64: 1, 31>}, {transform_indices = @transform_9, window_bounds = array<i64: 512, 31>}]} {
    %c0 = arith.constant 0 : index
    %c0_0 = arith.constant 0 : index
    %0 = vector.load %arg1[%c0, %c0_0] : memref<512x31xf32, #tpu.memory_space<vmem>>, vector<512x31xf32>
    %c0_1 = arith.constant 0 : index
    %c0_2 = arith.constant 0 : index
    %1 = vector.load %arg2[%c0_1, %c0_2] : memref<32x31xf32, #tpu.memory_space<vmem>>, vector<32x31xf32>
    %cst = arith.constant dense<0.000000e+00> : vector<32x512xf32>
    %2 = tpu.matmul %1, %0, %cst {dimension_numbers = #tpu.dot_dimension_numbers<[1], [1], [0], [0], [0, 0, 1, 0], [], []>} : vector<32x31xf32>, vector<512x31xf32>, vector<32x512xf32> -> vector<32x512xf32>
    %c0_3 = arith.constant 0 : index
    %c0_4 = arith.constant 0 : index
    %3 = vector.load %arg3[%c0_3, %c0_4] : memref<32x1xf32, #tpu.memory_space<vmem>>, vector<32x1xf32>
    %4 = vector.broadcast %3 : vector<32x1xf32> to vector<32x512xf32>
    %5 = arith.addf %2, %4 : vector<32x512xf32>
    %cst_5 = arith.constant 0.000000e+00 : f32
    %6 = vector.broadcast %cst_5 : f32 to vector<32x512xf32>
    %7 = arith.maximumf %5, %6 : vector<32x512xf32>
    %c0_6 = arith.constant 0 : index
    %c0_7 = arith.constant 0 : index
    %8 = vector.load %arg4[%c0_6, %c0_7] : memref<32x32xf32, #tpu.memory_space<vmem>>, vector<32x32xf32>
    %cst_8 = arith.constant dense<0.000000e+00> : vector<32x512xf32>
    %9 = tpu.matmul %8, %7, %cst_8 {dimension_numbers = #tpu.dot_dimension_numbers<[1], [0], [0], [1], [0, 0, 1, 1], [], []>} : vector<32x32xf32>, vector<32x512xf32>, vector<32x512xf32> -> vector<32x512xf32>
    %c0_9 = arith.constant 0 : index
    %c0_10 = arith.constant 0 : index
    %10 = vector.load %arg5[%c0_9, %c0_10] : memref<32x1xf32, #tpu.memory_space<vmem>>, vector<32x1xf32>
    %11 = vector.broadcast %10 : vector<32x1xf32> to vector<32x512xf32>
    %12 = arith.addf %9, %11 : vector<32x512xf32>
    %cst_11 = arith.constant 0.000000e+00 : f32
    %13 = vector.broadcast %cst_11 : f32 to vector<32x512xf32>
    %14 = arith.maximumf %12, %13 : vector<32x512xf32>
    %c0_12 = arith.constant 0 : index
    %c0_13 = arith.constant 0 : index
    %15 = vector.load %arg6[%c0_12, %c0_13] : memref<32x32xf32, #tpu.memory_space<vmem>>, vector<32x32xf32>
    %cst_14 = arith.constant dense<0.000000e+00> : vector<32x512xf32>
    %16 = tpu.matmul %15, %14, %cst_14 {dimension_numbers = #tpu.dot_dimension_numbers<[1], [0], [0], [1], [0, 0, 1, 1], [], []>} : vector<32x32xf32>, vector<32x512xf32>, vector<32x512xf32> -> vector<32x512xf32>
    %c0_15 = arith.constant 0 : index
    %c0_16 = arith.constant 0 : index
    %17 = vector.load %arg7[%c0_15, %c0_16] : memref<32x1xf32, #tpu.memory_space<vmem>>, vector<32x1xf32>
    %18 = vector.broadcast %17 : vector<32x1xf32> to vector<32x512xf32>
    %19 = arith.addf %16, %18 : vector<32x512xf32>
    %cst_17 = arith.constant 0.000000e+00 : f32
    %20 = vector.broadcast %cst_17 : f32 to vector<32x512xf32>
    %21 = arith.maximumf %19, %20 : vector<32x512xf32>
    %c0_18 = arith.constant 0 : index
    %c0_19 = arith.constant 0 : index
    %22 = vector.load %arg8[%c0_18, %c0_19] : memref<32x31xf32, #tpu.memory_space<vmem>>, vector<32x31xf32>
    %cst_20 = arith.constant dense<0.000000e+00> : vector<512x31xf32>
    %23 = tpu.matmul %21, %22, %cst_20 {dimension_numbers = #tpu.dot_dimension_numbers<[0], [0], [1], [1], [0, 1, 1, 1], [], []>} : vector<32x512xf32>, vector<32x31xf32>, vector<512x31xf32> -> vector<512x31xf32>
    %c0_21 = arith.constant 0 : index
    %c0_22 = arith.constant 0 : index
    %24 = vector.load %arg9[%c0_21, %c0_22] : memref<1x31xf32, #tpu.memory_space<vmem>>, vector<1x31xf32>
    %25 = vector.broadcast %24 : vector<1x31xf32> to vector<512x31xf32>
    %26 = arith.addf %23, %25 : vector<512x31xf32>
    %cst_23 = arith.constant 0.000000e+00 : f32
    %27 = vector.broadcast %cst_23 : f32 to vector<512x31xf32>
    %28 = arith.maximumf %26, %27 : vector<512x31xf32>
    %c0_24 = arith.constant 0 : index
    %c0_25 = arith.constant 0 : index
    %29 = vector.load %arg10[%c0_24, %c0_25] : memref<512x31xf32, #tpu.memory_space<vmem>>, vector<512x31xf32>
    tpu.vector_store %arg10[%c0_24, %c0_25], %28 {strides = array<i32>} : memref<512x31xf32, #tpu.memory_space<vmem>>, vector<512x31xf32>,
    return
  }
  func.func @transform_0(%arg0: i32) -> (i32, i32) {
    %c0_i32 = arith.constant 0 : i32
    %c0_i32_0 = arith.constant 0 : i32
    return %arg0, %c0_i32 : i32, i32
  }
  func.func @transform_1(%arg0: i32) -> (i32, i32) {
    %c0_i32 = arith.constant 0 : i32
    %c0_i32_0 = arith.constant 0 : i32
    %c0_i32_1 = arith.constant 0 : i32
    return %c0_i32, %c0_i32_0 : i32, i32
  }
  func.func @transform_2(%arg0: i32) -> (i32, i32) {
    %c0_i32 = arith.constant 0 : i32
    %c0_i32_0 = arith.constant 0 : i32
    %c0_i32_1 = arith.constant 0 : i32
    return %c0_i32, %c0_i32_0 : i32, i32
  }
  func.func @transform_3(%arg0: i32) -> (i32, i32) {
    %c0_i32 = arith.constant 0 : i32
    %c0_i32_0 = arith.constant 0 : i32
    %c0_i32_1 = arith.constant 0 : i32
    return %c0_i32, %c0_i32_0 : i32, i32
  }
  func.func @transform_4(%arg0: i32) -> (i32, i32) {
    %c0_i32 = arith.constant 0 : i32
    %c0_i32_0 = arith.constant 0 : i32
    %c0_i32_1 = arith.constant 0 : i32
    return %c0_i32, %c0_i32_0 : i32, i32
  }
  func.func @transform_5(%arg0: i32) -> (i32, i32) {
    %c0_i32 = arith.constant 0 : i32
    %c0_i32_0 = arith.constant 0 : i32
    %c0_i32_1 = arith.constant 0 : i32
    return %c0_i32, %c0_i32_0 : i32, i32
  }
  func.func @transform_6(%arg0: i32) -> (i32, i32) {
    %c0_i32 = arith.constant 0 : i32
    %c0_i32_0 = arith.constant 0 : i32
    %c0_i32_1 = arith.constant 0 : i32
    return %c0_i32, %c0_i32_0 : i32, i32
  }
  func.func @transform_7(%arg0: i32) -> (i32, i32) {
    %c0_i32 = arith.constant 0 : i32
    %c0_i32_0 = arith.constant 0 : i32
    %c0_i32_1 = arith.constant 0 : i32
    return %c0_i32, %c0_i32_0 : i32, i32
  }
  func.func @transform_8(%arg0: i32) -> (i32, i32) {
    %c0_i32 = arith.constant 0 : i32
    %c0_i32_0 = arith.constant 0 : i32
    %c0_i32_1 = arith.constant 0 : i32
    return %c0_i32, %c0_i32_0 : i32, i32
  }
  func.func @transform_9(%arg0: i32) -> (i32, i32) {
    %c0_i32 = arith.constant 0 : i32
    %c0_i32_0 = arith.constant 0 : i32
    return %arg0, %c0_i32 : i32, i32
  }
}

module attributes {stable_mosaic.version = 11 : i64} {
  func.func @_feature_major_kernel(%arg0: i32, %arg1: memref<32x512xf32, #tpu.memory_space<vmem>>, %arg2: memref<4x32x32xf32, #tpu.memory_space<vmem>>, %arg3: memref<4x32x1xf32, #tpu.memory_space<vmem>>, %arg4: memref<32x512xf32, #tpu.memory_space<vmem>>) attributes {dimension_semantics = [#tpu.dimension_semantics<parallel>], iteration_bounds = array<i64: 2>, scalar_prefetch = 0 : i64, scratch_operands = 0 : i64, tpu.core_type = #tpu.core_type<tc>, window_params = [{transform_indices = @transform_0, window_bounds = array<i64: 32, 512>}, {pipeline_mode = #tpu.pipeline_mode<synchronous>, transform_indices = @transform_1, window_bounds = array<i64: 4, 32, 32>}, {pipeline_mode = #tpu.pipeline_mode<synchronous>, transform_indices = @transform_2, window_bounds = array<i64: 4, 32, 1>}, {transform_indices = @transform_3, window_bounds = array<i64: 32, 512>}]} {
    %c0 = arith.constant 0 : index
    %c0_0 = arith.constant 0 : index
    %0 = vector.load %arg1[%c0, %c0_0] : memref<32x512xf32, #tpu.memory_space<vmem>>, vector<32x512xf32>
    %c0_1 = arith.constant 0 : index
    %c0_2 = arith.constant 0 : index
    %c0_3 = arith.constant 0 : index
    %1 = vector.load %arg2[%c0_1, %c0_2, %c0_3] : memref<4x32x32xf32, #tpu.memory_space<vmem>>, vector<1x32x32xf32>
    %2 = vector.shape_cast %1 : vector<1x32x32xf32> to vector<32x32xf32>
    %cst = arith.constant dense<0.000000e+00> : vector<32x512xf32>
    %3 = tpu.matmul %2, %0, %cst {dimension_numbers = #tpu.dot_dimension_numbers<[1], [0], [0], [1], [0, 0, 1, 1], [], []>} : vector<32x32xf32>, vector<32x512xf32>, vector<32x512xf32> -> vector<32x512xf32>
    %c0_4 = arith.constant 0 : index
    %c0_5 = arith.constant 0 : index
    %c0_6 = arith.constant 0 : index
    %4 = vector.load %arg3[%c0_4, %c0_5, %c0_6] : memref<4x32x1xf32, #tpu.memory_space<vmem>>, vector<1x32x1xf32>
    %5 = vector.shape_cast %4 : vector<1x32x1xf32> to vector<32x1xf32>
    %6 = vector.broadcast %5 : vector<32x1xf32> to vector<32x512xf32>
    %7 = arith.addf %3, %6 : vector<32x512xf32>
    %cst_7 = arith.constant 0.000000e+00 : f32
    %8 = vector.broadcast %cst_7 : f32 to vector<32x512xf32>
    %9 = arith.maximumf %7, %8 : vector<32x512xf32>
    %c1 = arith.constant 1 : index
    %c0_8 = arith.constant 0 : index
    %c0_9 = arith.constant 0 : index
    %10 = vector.load %arg2[%c1, %c0_8, %c0_9] : memref<4x32x32xf32, #tpu.memory_space<vmem>>, vector<1x32x32xf32>
    %11 = vector.shape_cast %10 : vector<1x32x32xf32> to vector<32x32xf32>
    %cst_10 = arith.constant dense<0.000000e+00> : vector<32x512xf32>
    %12 = tpu.matmul %11, %9, %cst_10 {dimension_numbers = #tpu.dot_dimension_numbers<[1], [0], [0], [1], [0, 0, 1, 1], [], []>} : vector<32x32xf32>, vector<32x512xf32>, vector<32x512xf32> -> vector<32x512xf32>
    %c1_11 = arith.constant 1 : index
    %c0_12 = arith.constant 0 : index
    %c0_13 = arith.constant 0 : index
    %13 = vector.load %arg3[%c1_11, %c0_12, %c0_13] : memref<4x32x1xf32, #tpu.memory_space<vmem>>, vector<1x32x1xf32>
    %14 = vector.shape_cast %13 : vector<1x32x1xf32> to vector<32x1xf32>
    %15 = vector.broadcast %14 : vector<32x1xf32> to vector<32x512xf32>
    %16 = arith.addf %12, %15 : vector<32x512xf32>
    %cst_14 = arith.constant 0.000000e+00 : f32
    %17 = vector.broadcast %cst_14 : f32 to vector<32x512xf32>
    %18 = arith.maximumf %16, %17 : vector<32x512xf32>
    %c2 = arith.constant 2 : index
    %c0_15 = arith.constant 0 : index
    %c0_16 = arith.constant 0 : index
    %19 = vector.load %arg2[%c2, %c0_15, %c0_16] : memref<4x32x32xf32, #tpu.memory_space<vmem>>, vector<1x32x32xf32>
    %20 = vector.shape_cast %19 : vector<1x32x32xf32> to vector<32x32xf32>
    %cst_17 = arith.constant dense<0.000000e+00> : vector<32x512xf32>
    %21 = tpu.matmul %20, %18, %cst_17 {dimension_numbers = #tpu.dot_dimension_numbers<[1], [0], [0], [1], [0, 0, 1, 1], [], []>} : vector<32x32xf32>, vector<32x512xf32>, vector<32x512xf32> -> vector<32x512xf32>
    %c2_18 = arith.constant 2 : index
    %c0_19 = arith.constant 0 : index
    %c0_20 = arith.constant 0 : index
    %22 = vector.load %arg3[%c2_18, %c0_19, %c0_20] : memref<4x32x1xf32, #tpu.memory_space<vmem>>, vector<1x32x1xf32>
    %23 = vector.shape_cast %22 : vector<1x32x1xf32> to vector<32x1xf32>
    %24 = vector.broadcast %23 : vector<32x1xf32> to vector<32x512xf32>
    %25 = arith.addf %21, %24 : vector<32x512xf32>
    %cst_21 = arith.constant 0.000000e+00 : f32
    %26 = vector.broadcast %cst_21 : f32 to vector<32x512xf32>
    %27 = arith.maximumf %25, %26 : vector<32x512xf32>
    %c3 = arith.constant 3 : index
    %c0_22 = arith.constant 0 : index
    %c0_23 = arith.constant 0 : index
    %28 = vector.load %arg2[%c3, %c0_22, %c0_23] : memref<4x32x32xf32, #tpu.memory_space<vmem>>, vector<1x32x32xf32>
    %29 = vector.shape_cast %28 : vector<1x32x32xf32> to vector<32x32xf32>
    %cst_24 = arith.constant dense<0.000000e+00> : vector<32x512xf32>
    %30 = tpu.matmul %29, %27, %cst_24 {dimension_numbers = #tpu.dot_dimension_numbers<[1], [0], [0], [1], [0, 0, 1, 1], [], []>} : vector<32x32xf32>, vector<32x512xf32>, vector<32x512xf32> -> vector<32x512xf32>
    %c3_25 = arith.constant 3 : index
    %c0_26 = arith.constant 0 : index
    %c0_27 = arith.constant 0 : index
    %31 = vector.load %arg3[%c3_25, %c0_26, %c0_27] : memref<4x32x1xf32, #tpu.memory_space<vmem>>, vector<1x32x1xf32>
    %32 = vector.shape_cast %31 : vector<1x32x1xf32> to vector<32x1xf32>
    %33 = vector.broadcast %32 : vector<32x1xf32> to vector<32x512xf32>
    %34 = arith.addf %30, %33 : vector<32x512xf32>
    %cst_28 = arith.constant 0.000000e+00 : f32
    %35 = vector.broadcast %cst_28 : f32 to vector<32x512xf32>
    %36 = arith.maximumf %34, %35 : vector<32x512xf32>
    %c0_29 = arith.constant 0 : index
    %c0_30 = arith.constant 0 : index
    %37 = vector.load %arg4[%c0_29, %c0_30] : memref<32x512xf32, #tpu.memory_space<vmem>>, vector<32x512xf32>
    tpu.vector_store %arg4[%c0_29, %c0_30], %36 {strides = array<i32>} : memref<32x512xf32, #tpu.memory_space<vmem>>, vector<32x512xf32>,
    return
  }
  func.func @transform_0(%arg0: i32) -> (i32, i32) {
    %c0_i32 = arith.constant 0 : i32
    %c0_i32_0 = arith.constant 0 : i32
    return %c0_i32, %arg0 : i32, i32
  }
  func.func @transform_1(%arg0: i32) -> (i32, i32, i32) {
    %c0_i32 = arith.constant 0 : i32
    %c0_i32_0 = arith.constant 0 : i32
    %c0_i32_1 = arith.constant 0 : i32
    %c0_i32_2 = arith.constant 0 : i32
    return %c0_i32, %c0_i32_0, %c0_i32_1 : i32, i32, i32
  }
  func.func @transform_2(%arg0: i32) -> (i32, i32, i32) {
    %c0_i32 = arith.constant 0 : i32
    %c0_i32_0 = arith.constant 0 : i32
    %c0_i32_1 = arith.constant 0 : i32
    %c0_i32_2 = arith.constant 0 : i32
    return %c0_i32, %c0_i32_0, %c0_i32_1 : i32, i32, i32
  }
  func.func @transform_3(%arg0: i32) -> (i32, i32) {
    %c0_i32 = arith.constant 0 : i32
    %c0_i32_0 = arith.constant 0 : i32
    return %c0_i32, %arg0 : i32, i32
  }
}

</mosaic_0001>

<llo_original>
// kernel: denoise_forward_fused.1
$region0: #{denoise_forward_fused.1}
  #allocation0 [shape = 'u32[]', space=smem, size = 0x4, offset = 0x4, fixed_abs, tag = 'smem constant byte address 0x4 - core index']
  #allocation1 [shape = 'u32[72,128]{1,0:T(1,128)}', space=vmem, size = 0x9000, scoped, tag = 'internal scratch']
  %s0 = inlined_call_operand.vmem [shape: f32[1024,31], index: 0, kind: input, shape index: {}]
  %s1 = inlined_call_operand.vmem [shape: f32[32,31], index: 1, kind: input, shape index: {}]
  %s2 = inlined_call_operand.vmem [shape: f32[32,1], index: 2, kind: input, shape index: {}]
  %s3 = inlined_call_operand.vmem [shape: f32[32,32], index: 3, kind: input, shape index: {}]
  %s4 = inlined_call_operand.vmem [shape: f32[32,1], index: 4, kind: input, shape index: {}]
  %s5 = inlined_call_operand.vmem [shape: f32[32,32], index: 5, kind: input, shape index: {}]
  %s6 = inlined_call_operand.vmem [shape: f32[32,1], index: 6, kind: input, shape index: {}]
  %s7 = inlined_call_operand.vmem [shape: f32[32,31], index: 7, kind: input, shape index: {}]
  %s8 = inlined_call_operand.vmem [shape: f32[1,31], index: 8, kind: input, shape index: {}]
  %s9 = inlined_call_operand.vmem [shape: f32[1024,31], index: 9, kind: output, shape index: {}]
  %s10 = sld [smem:[#allocation0]]
  $region69: #{denoise_forward_fused.1} parent=0
    _
  %s12 = ssub.s32 1, %s10
  %s13 = scalar_select 0, %s12, %s10
  loop: start=0, step=1, limit=4
  $region2: #{denoise_forward_fused.1} parent=0 // loop_pre_header
    _
  $region3: #{denoise_forward_fused.1} parent=0 // loop_header
    %s15 = sphi 0, %s19
    %p16 = scmp.ge.s32.totalorder %s15, 4
    %s25 = sphi 0, %s27
    %s28 = sphi 0, %s25
    %s29 = sphi 0, %s28
    %s45 = sphi 0, %s29
    %s49 = sphi 0, %s49
    %s51 = sphi 0, %s49
    %s52 = sphi 0, %s51
    %s66 = sphi 0, %s52
    %s70 = sphi 0, %s70
    %s72 = sphi 0, %s70
    %s73 = sphi 0, %s72
    %s87 = sphi 0, %s73
    %s91 = sphi 0, %s91
    %s93 = sphi 0, %s91
    %s94 = sphi 0, %s93
    %s108 = sphi 0, %s94
    %s112 = sphi 0, %s112
    %s114 = sphi 0, %s112
    %s115 = sphi 0, %s114
    %s129 = sphi 0, %s115
    %s133 = sphi 0, %s133
    %s135 = sphi 0, %s133
    %s136 = sphi 0, %s135
    %s150 = sphi 0, %s136
    %s154 = sphi 0, %s154
    %s156 = sphi 0, %s154
    %s157 = sphi 0, %s156
    %s171 = sphi 0, %s157
    %s175 = sphi 0, %s175
    %s177 = sphi 0, %s175
    %s178 = sphi 0, %s177
    %s192 = sphi 0, %s178
    %s196 = sphi 0, %s196
    %s198 = sphi 0, %s196
    %s199 = sphi 0, %s198
    %s213 = sphi 0, %s199
    %s219 = sphi 0, %s221
    %s222 = sphi 0, %s219
    %s223 = sphi 0, %s222
    %s239 = sphi 0, %s223
  $region4: #{denoise_forward_fused.1} parent=0 // loop_header_branch
    %18 = sbr.rel (%p16) target = $region8
  $region5: #{denoise_forward_fused.1} parent=0 // loop_body
    %s20 = ssub.s32 %s15, 1
    %s21 = ssub.s32 %s15, 2
    %s22 = sadd.s32 %s15, 1
    %s23 = ssub.s32 %s15, %s22
    %p24 = scmp.eq.s32.totalorder %s23, 0
    %s26 = sadd.s32 %s25, 1
    %s27 = scalar_select %p24, %s25, %s26
    %p30 = pneg %p24
    %p31 = scmp.eq.s32.totalorder %s15, 1
    %p32 = por %p30, %p31
    %p33 = scmp.ne.s32.totalorder %s25, %s28
    %p34 = scmp.eq.s32.totalorder %s15, 0
    %p35 = por %p33, %p34
    %p36 = scmp.ne.s32.totalorder %s25, %s28
    %p37 = scmp.eq.s32.totalorder %s20, 1
    %p38 = por %p36, %p37
    %p39 = scmp.ne.s32.totalorder %s28, %s29
    %p40 = scmp.eq.s32.totalorder %s20, 0
    %p41 = por %p39, %p40
    %p42 = scmp.ne.s32.totalorder %s28, %s29
    %p43 = scmp.eq.s32.totalorder %s21, 1
    %p44 = por %p42, %p43
    %p46 = scmp.ne.s32.totalorder %s29, %s45
    %p47 = scmp.eq.s32.totalorder %s21, 0
    %p48 = por %p46, %p47
    %s50 = sadd.s32 %s49, 1
    %p53 = scmp.eq.s32.totalorder %s15, 1
    %p54 = scmp.ne.s32.totalorder %s49, %s51
    %p55 = scmp.eq.s32.totalorder %s15, 0
    %p56 = por %p54, %p55
    %p57 = scmp.ne.s32.totalorder %s49, %s51
    %p58 = scmp.eq.s32.totalorder %s20, 1
    %p59 = por %p57, %p58
    %p60 = scmp.ne.s32.totalorder %s51, %s52
    %p61 = scmp.eq.s32.totalorder %s20, 0
    %p62 = por %p60, %p61
    %p63 = scmp.ne.s32.totalorder %s51, %s52
    %p64 = scmp.eq.s32.totalorder %s21, 1
    %p65 = por %p63, %p64
    %p67 = scmp.ne.s32.totalorder %s52, %s66
    %p68 = scmp.eq.s32.totalorder %s21, 0
    %p69 = por %p67, %p68
    %s71 = sadd.s32 %s70, 1
    %p74 = scmp.eq.s32.totalorder %s15, 1
    %p75 = scmp.ne.s32.totalorder %s70, %s72
    %p76 = scmp.eq.s32.totalorder %s15, 0
    %p77 = por %p75, %p76
    %p78 = scmp.ne.s32.totalorder %s70, %s72
    %p79 = scmp.eq.s32.totalorder %s20, 1
    %p80 = por %p78, %p79
    %p81 = scmp.ne.s32.totalorder %s72, %s73
    %p82 = scmp.eq.s32.totalorder %s20, 0
    %p83 = por %p81, %p82
    %p84 = scmp.ne.s32.totalorder %s72, %s73
    %p85 = scmp.eq.s32.totalorder %s21, 1
    %p86 = por %p84, %p85
    %p88 = scmp.ne.s32.totalorder %s73, %s87
    %p89 = scmp.eq.s32.totalorder %s21, 0
    %p90 = por %p88, %p89
    %s92 = sadd.s32 %s91, 1
    %p95 = scmp.eq.s32.totalorder %s15, 1
    %p96 = scmp.ne.s32.totalorder %s91, %s93
    %p97 = scmp.eq.s32.totalorder %s15, 0
    %p98 = por %p96, %p97
    %p99 = scmp.ne.s32.totalorder %s91, %s93
    %p100 = scmp.eq.s32.totalorder %s20, 1
    %p101 = por %p99, %p100
    %p102 = scmp.ne.s32.totalorder %s93, %s94
    %p103 = scmp.eq.s32.totalorder %s20, 0
    %p104 = por %p102, %p103
    %p105 = scmp.ne.s32.totalorder %s93, %s94
    %p106 = scmp.eq.s32.totalorder %s21, 1
    %p107 = por %p105, %p106
    %p109 = scmp.ne.s32.totalorder %s94, %s108
    %p110 = scmp.eq.s32.totalorder %s21, 0
    %p111 = por %p109, %p110
    %s113 = sadd.s32 %s112, 1
    %p116 = scmp.eq.s32.totalorder %s15, 1
    %p117 = scmp.ne.s32.totalorder %s112, %s114
    %p118 = scmp.eq.s32.totalorder %s15, 0
    %p119 = por %p117, %p118
    %p120 = scmp.ne.s32.totalorder %s112, %s114
    %p121 = scmp.eq.s32.totalorder %s20, 1
    %p122 = por %p120, %p121
    %p123 = scmp.ne.s32.totalorder %s114, %s115
    %p124 = scmp.eq.s32.totalorder %s20, 0
    %p125 = por %p123, %p124
    %p126 = scmp.ne.s32.totalorder %s114, %s115
    %p127 = scmp.eq.s32.totalorder %s21, 1
    %p128 = por %p126, %p127
    %p130 = scmp.ne.s32.totalorder %s115, %s129
    %p131 = scmp.eq.s32.totalorder %s21, 0
    %p132 = por %p130, %p131
    %s134 = sadd.s32 %s133, 1
    %p137 = scmp.eq.s32.totalorder %s15, 1
    %p138 = scmp.ne.s32.totalorder %s133, %s135
    %p139 = scmp.eq.s32.totalorder %s15, 0
    %p140 = por %p138, %p139
    %p141 = scmp.ne.s32.totalorder %s133, %s135
    %p142 = scmp.eq.s32.totalorder %s20, 1
    %p143 = por %p141, %p142
    %p144 = scmp.ne.s32.totalorder %s135, %s136
    %p145 = scmp.eq.s32.totalorder %s20, 0
    %p146 = por %p144, %p145
    %p147 = scmp.ne.s32.totalorder %s135, %s136
    %p148 = scmp.eq.s32.totalorder %s21, 1
    %p149 = por %p147, %p148
    %p151 = scmp.ne.s32.totalorder %s136, %s150
    %p152 = scmp.eq.s32.totalorder %s21, 0
    %p153 = por %p151, %p152
    %s155 = sadd.s32 %s154, 1
    %p158 = scmp.eq.s32.totalorder %s15, 1
    %p159 = scmp.ne.s32.totalorder %s154, %s156
    %p160 = scmp.eq.s32.totalorder %s15, 0
    %p161 = por %p159, %p160
    %p162 = scmp.ne.s32.totalorder %s154, %s156
    %p163 = scmp.eq.s32.totalorder %s20, 1
    %p164 = por %p162, %p163
    %p165 = scmp.ne.s32.totalorder %s156, %s157
    %p166 = scmp.eq.s32.totalorder %s20, 0
    %p167 = por %p165, %p166
    %p168 = scmp.ne.s32.totalorder %s156, %s157
    %p169 = scmp.eq.s32.totalorder %s21, 1
    %p170 = por %p168, %p169
    %p172 = scmp.ne.s32.totalorder %s157, %s171
    %p173 = scmp.eq.s32.totalorder %s21, 0
    %p174 = por %p172, %p173
    %s176 = sadd.s32 %s175, 1
    %p179 = scmp.eq.s32.totalorder %s15, 1
    %p180 = scmp.ne.s32.totalorder %s175, %s177
    %p181 = scmp.eq.s32.totalorder %s15, 0
    %p182 = por %p180, %p181
    %p183 = scmp.ne.s32.totalorder %s175, %s177
    %p184 = scmp.eq.s32.totalorder %s20, 1
    %p185 = por %p183, %p184
    %p186 = scmp.ne.s32.totalorder %s177, %s178
    %p187 = scmp.eq.s32.totalorder %s20, 0
    %p188 = por %p186, %p187
    %p189 = scmp.ne.s32.totalorder %s177, %s178
    %p190 = scmp.eq.s32.totalorder %s21, 1
    %p191 = por %p189, %p190
    %p193 = scmp.ne.s32.totalorder %s178, %s192
    %p194 = scmp.eq.s32.totalorder %s21, 0
    %p195 = por %p193, %p194
    %s197 = sadd.s32 %s196, 1
    %p200 = scmp.eq.s32.totalorder %s15, 1
    %p201 = scmp.ne.s32.totalorder %s196, %s198
    %p202 = scmp.eq.s32.totalorder %s15, 0
    %p203 = por %p201, %p202
    %p204 = scmp.ne.s32.totalorder %s196, %s198
    %p205 = scmp.eq.s32.totalorder %s20, 1
    %p206 = por %p204, %p205
    %p207 = scmp.ne.s32.totalorder %s198, %s199
    %p208 = scmp.eq.s32.totalorder %s20, 0
    %p209 = por %p207, %p208
    %p210 = scmp.ne.s32.totalorder %s198, %s199
    %p211 = scmp.eq.s32.totalorder %s21, 1
    %p212 = por %p210, %p211
    %p214 = scmp.ne.s32.totalorder %s199, %s213
    %p215 = scmp.eq.s32.totalorder %s21, 0
    %p216 = por %p214, %p215
    %s217 = ssub.s32 %s15, %s22
    %p218 = scmp.eq.s32.totalorder %s217, 0
    %s220 = sadd.s32 %s219, 1
    %s221 = scalar_select %p218, %s219, %s220
    %p224 = pneg %p218
    %p225 = scmp.eq.s32.totalorder %s15, 1
    %p226 = por %p224, %p225
    %p227 = scmp.ne.s32.totalorder %s219, %s222
    %p228 = scmp.eq.s32.totalorder %s15, 0
    %p229 = por %p227, %p228
    %p230 = scmp.ne.s32.totalorder %s219, %s222
    %p231 = scmp.eq.s32.totalorder %s20, 1
    %p232 = por %p230, %p231
    %p233 = scmp.ne.s32.totalorder %s222, %s223
    %p234 = scmp.eq.s32.totalorder %s20, 0
    %p235 = por %p233, %p234
    %p236 = scmp.ne.s32.totalorder %s222, %s223
    %p237 = scmp.eq.s32.totalorder %s21, 1
    %p238 = por %p236, %p237
    %p240 = scmp.ne.s32.totalorder %s223, %s239
    %p241 = scmp.eq.s32.totalorder %s21, 0
    %p242 = por %p240, %p241
    %p243 = scmp.le.s32.totalorder 1, %s15
    %p244 = scmp.lt.s32.totalorder %s15, 3
    %p245 = pnand %p243, %p244
    %p246 = pneg %p245
    // Predicated region
    $region9: #{denoise_forward_fused.1} parent=5 // pred_check
      _
    $region10: #{denoise_forward_fused.1} parent=5 // pred_check_branch
      %248 = sbr.rel (%p245) target = $region12
    $region11: #{denoise_forward_fused.1} parent=5 // pred_region
      %s249 = ssub.s32 %s15, 1
      // Predicated region
      $region13: #{denoise_forward_fused.1} parent=11 // pred_check
        %p250 = pneg %p62
      $region14: #{denoise_forward_fused.1} parent=11 // pred_check_branch
        %252 = sbr.rel (%p250) target = $region16
      $region15: #{denoise_forward_fused.1} parent=11 // pred_region
        _
      $region16: #{denoise_forward_fused.1} parent=11 // pred_fallthru
        _
      // Predicated region
      $region17: #{denoise_forward_fused.1} parent=11 // pred_check
        %p253 = pneg %p83
      $region18: #{denoise_forward_fused.1} parent=11 // pred_check_branch
        %255 = sbr.rel (%p253) target = $region20
      $region19: #{denoise_forward_fused.1} parent=11 // pred_region
        _
      $region20: #{denoise_forward_fused.1} parent=11 // pred_fallthru
        _
      // Predicated region
      $region21: #{denoise_forward_fused.1} parent=11 // pred_check
        %p256 = pneg %p104
      $region22: #{denoise_forward_fused.1} parent=11 // pred_check_branch
        %258 = sbr.rel (%p256) target = $region24
      $region23: #{denoise_forward_fused.1} parent=11 // pred_region
        _
      $region24: #{denoise_forward_fused.1} parent=11 // pred_fallthru
        _
      // Predicated region
      $region25: #{denoise_forward_fused.1} parent=11 // pred_check
        %p259 = pneg %p125
      $region26: #{denoise_forward_fused.1} parent=11 // pred_check_branch
        %261 = sbr.rel (%p259) target = $region28
      $region27: #{denoise_forward_fused.1} parent=11 // pred_region
        _
      $region28: #{denoise_forward_fused.1} parent=11 // pred_fallthru
        _
      // Predicated region
      $region29: #{denoise_forward_fused.1} parent=11 // pred_check
        %p262 = pneg %p146
      $region30: #{denoise_forward_fused.1} parent=11 // pred_check_branch
        %264 = sbr.rel (%p262) target = $region32
      $region31: #{denoise_forward_fused.1} parent=11 // pred_region
        _
      $region32: #{denoise_forward_fused.1} parent=11 // pred_fallthru
        _
      // Predicated region
      $region33: #{denoise_forward_fused.1} parent=11 // pred_check
        %p265 = pneg %p167
      $region34: #{denoise_forward_fused.1} parent=11 // pred_check_branch
        %267 = sbr.rel (%p265) target = $region36
      $region35: #{denoise_forward_fused.1} parent=11 // pred_region
        _
      $region36: #{denoise_forward_fused.1} parent=11 // pred_fallthru
        _
      // Predicated region
      $region37: #{denoise_forward_fused.1} parent=11 // pred_check
        %p268 = pneg %p188
      $region38: #{denoise_forward_fused.1} parent=11 // pred_check_branch
        %270 = sbr.rel (%p268) target = $region40
      $region39: #{denoise_forward_fused.1} parent=11 // pred_region
        _
      $region40: #{denoise_forward_fused.1} parent=11 // pred_fallthru
        _
      // Predicated region
      $region41: #{denoise_forward_fused.1} parent=11 // pred_check
        %p271 = pneg %p209
      $region42: #{denoise_forward_fused.1} parent=11 // pred_check_branch
        %273 = sbr.rel (%p271) target = $region44
      $region43: #{denoise_forward_fused.1} parent=11 // pred_region
        _
      $region44: #{denoise_forward_fused.1} parent=11 // pred_fallthru
        _
    $region12: #{denoise_forward_fused.1} parent=5 // pred_fallthru
      _
    %p274 = scmp.lt.s32.totalorder %s15, 2
    // Predicated region
    $region45: #{denoise_forward_fused.1} parent=5 // pred_check
      %p275 = pneg %p274
    $region46: #{denoise_forward_fused.1} parent=5 // pred_check_branch
      %277 = sbr.rel (%p275) target = $region48
    $region47: #{denoise_forward_fused.1} parent=5 // pred_region
      // Predicated region
      $region49: #{denoise_forward_fused.1} parent=47 // pred_check
        %p278 = pneg %p35
      $region50: #{denoise_forward_fused.1} parent=47 // pred_check_branch
        %280 = sbr.rel (%p278) target = $region52
      $region51: #{denoise_forward_fused.1} parent=47 // pred_region
        %s281 = smul.u32 64, %s15
        %p282 = scmp.lt.s32.totalorder %s281, 127
        %s283 = scalar_select %p282, %s281, 127
        %s284 = smul.addr %s283, 8
        %s285 = scalar_lea.vmem %s0, %s284
        %s286 = smul.u32 64, %s15
      $region52: #{denoise_forward_fused.1} parent=47 // pred_fallthru
        _
    $region48: #{denoise_forward_fused.1} parent=5 // pred_fallthru
      _
    %p287 = scmp.le.s32.totalorder 1, %s15
    %p288 = scmp.lt.s32.totalorder %s15, 3
    %p289 = pnand %p287, %p288
    %p290 = pneg %p289
    // Predicated region
    $region53: #{denoise_forward_fused.1} parent=5 // pred_check
      _
    $region54: #{denoise_forward_fused.1} parent=5 // pred_check_branch
      %292 = sbr.rel (%p289) target = $region56
    $region55: #{denoise_forward_fused.1} parent=5 // pred_region
      %s293 = ssub.s32 %s15, 1
      %s294 = smul.u32 64, %s20
      %p295 = scmp.lt.s32.totalorder %s294, 127
      %s296 = scalar_select %p295, %s294, 127
      %s297 = smul.addr %s296, 8
      %s298 = scalar_lea.vmem %s0, %s297
      %p299 = pneg %p41
      %p300 = pneg %p38
      %p301 = pneg %p62
      %p302 = pneg %p59
      %p303 = pneg %p83
      %p304 = pneg %p80
      %p305 = pneg %p104
      %p306 = pneg %p101
      %p307 = pneg %p125
      %p308 = pneg %p122
      %p309 = pneg %p146
      %p310 = pneg %p143
      %p311 = pneg %p167
      %p312 = pneg %p164
      %p313 = pneg %p188
      %p314 = pneg %p185
      %p315 = pneg %p209
      %p316 = pneg %p206
      %p317 = pneg %p235
      %p318 = pneg %p232
      %s319 = smul.u32 64, %s20
      %p320 = scmp.lt.s32.totalorder %s319, 127
      %s321 = scalar_select %p320, %s319, 127
      %s322 = smul.addr %s321, 8
      %s323 = scalar_lea.vmem %s9, %s322
      %s324 = smul.u32 64, %s20
      %p325 = scmp.lt.s32.totalorder %s324, 127
      %s326 = scalar_select %p325, %s324, 127
      %s327 = smul.addr %s326, 8
      %s328 = scalar_lea.vmem %s0, %s327
      %s329 = smul.u32 64, %s20
      %s330 = smul.u32 64, %s20
      %p331 = scmp.lt.s32.totalorder %s330, 127
      %s332 = scalar_select %p331, %s330, 127
      %s333 = smul.addr %s332, 8
      %s334 = scalar_lea.vmem %s9, %s333
      %s335 = smul.u32 64, %s20
      %v336 = vld [vmem:[%s328] sm:$0xff]
      %v337 = vld [vmem:[%s328 + $0x8] sm:$0xff]
      %v338 = vld [vmem:[%s328 + $0x10] sm:$0xff]
      %v339 = vld [vmem:[%s328 + $0x18] sm:$0xff]
      %v340 = vld [vmem:[%s328 + $0x20] sm:$0xff]
      %v341 = vld [vmem:[%s328 + $0x28] sm:$0xff]
      %v342 = vld [vmem:[%s328 + $0x30] sm:$0xff]
      %v343 = vld [vmem:[%s328 + $0x38] sm:$0xff]
      %v344 = vld [vmem:[%s328 + $0x40] sm:$0xff]
      %v345 = vld [vmem:[%s328 + $0x48] sm:$0xff]
      %v346 = vld [vmem:[%s328 + $0x50] sm:$0xff]
      %v347 = vld [vmem:[%s328 + $0x58] sm:$0xff]
      %v348 = vld [vmem:[%s328 + $0x60] sm:$0xff]
      %v349 = vld [vmem:[%s328 + $0x68] sm:$0xff]
      %v350 = vld [vmem:[%s328 + $0x70] sm:$0xff]
      %v351 = vld [vmem:[%s328 + $0x78] sm:$0xff]
      %v352 = vld [vmem:[%s328 + $0x80] sm:$0xff]
      %v353 = vld [vmem:[%s328 + $0x88] sm:$0xff]
      %v354 = vld [vmem:[%s328 + $0x90] sm:$0xff]
      %v355 = vld [vmem:[%s328 + $0x98] sm:$0xff]
      %v356 = vld [vmem:[%s328 + $0xa0] sm:$0xff]
      %v357 = vld [vmem:[%s328 + $0xa8] sm:$0xff]
      %v358 = vld [vmem:[%s328 + $0xb0] sm:$0xff]
      %v359 = vld [vmem:[%s328 + $0xb8] sm:$0xff]
      %v360 = vld [vmem:[%s328 + $0xc0] sm:$0xff]
      %v361 = vld [vmem:[%s328 + $0xc8] sm:$0xff]
      %v362 = vld [vmem:[%s328 + $0xd0] sm:$0xff]
      %v363 = vld [vmem:[%s328 + $0xd8] sm:$0xff]
      %v364 = vld [vmem:[%s328 + $0xe0] sm:$0xff]
      %v365 = vld [vmem:[%s328 + $0xe8] sm:$0xff]
      %v366 = vld [vmem:[%s328 + $0xf0] sm:$0xff]
      %v367 = vld [vmem:[%s328 + $0xf8] sm:$0xff]
      %v368 = vld [vmem:[%s328 + $0x100] sm:$0xff]
      %v369 = vld [vmem:[%s328 + $0x108] sm:$0xff]
      %v370 = vld [vmem:[%s328 + $0x110] sm:$0xff]
      %v371 = vld [vmem:[%s328 + $0x118] sm:$0xff]
      %v372 = vld [vmem:[%s328 + $0x120] sm:$0xff]
      %v373 = vld [vmem:[%s328 + $0x128] sm:$0xff]
      %v374 = vld [vmem:[%s328 + $0x130] sm:$0xff]
      %v375 = vld [vmem:[%s328 + $0x138] sm:$0xff]
      %v376 = vld [vmem:[%s328 + $0x140] sm:$0xff]
      %v377 = vld [vmem:[%s328 + $0x148] sm:$0xff]
      %v378 = vld [vmem:[%s328 + $0x150] sm:$0xff]
      %v379 = vld [vmem:[%s328 + $0x158] sm:$0xff]
      %v380 = vld [vmem:[%s328 + $0x160] sm:$0xff]
      %v381 = vld [vmem:[%s328 + $0x168] sm:$0xff]
      %v382 = vld [vmem:[%s328 + $0x170] sm:$0xff]
      %v383 = vld [vmem:[%s328 + $0x178] sm:$0xff]
      %v384 = vld [vmem:[%s328 + $0x180] sm:$0xff]
      %v385 = vld [vmem:[%s328 + $0x188] sm:$0xff]
      %v386 = vld [vmem:[%s328 + $0x190] sm:$0xff]
      %v387 = vld [vmem:[%s328 + $0x198] sm:$0xff]
      %v388 = vld [vmem:[%s328 + $0x1a0] sm:$0xff]
      %v389 = vld [vmem:[%s328 + $0x1a8] sm:$0xff]
      %v390 = vld [vmem:[%s328 + $0x1b0] sm:$0xff]
      %v391 = vld [vmem:[%s328 + $0x1b8] sm:$0xff]
      %v392 = vld [vmem:[%s328 + $0x1c0] sm:$0xff]
      %v393 = vld [vmem:[%s328 + $0x1c8] sm:$0xff]
      %v394 = vld [vmem:[%s328 + $0x1d0] sm:$0xff]
      %v395 = vld [vmem:[%s328 + $0x1d8] sm:$0xff]
      %v396 = vld [vmem:[%s328 + $0x1e0] sm:$0xff]
      %v397 = vld [vmem:[%s328 + $0x1e8] sm:$0xff]
      %v398 = vld [vmem:[%s328 + $0x1f0] sm:$0xff]
      %v399 = vld [vmem:[%s328 + $0x1f8] sm:$0xff]
      %v400 = vld [vmem:[%s1] sm:$0xff]
      %v401 = vld [vmem:[%s1 + $0x8] sm:$0xff]
      %v402 = vld [vmem:[%s1 + $0x10] sm:$0xff]
      %v403 = vld [vmem:[%s1 + $0x18] sm:$0xff]
      %v404 = vld [vmem:[%s2] sm:$0xff]
      %v405 = vld [vmem:[%s2 + $0x8] sm:$0xff]
      %v406 = vld [vmem:[%s2 + $0x10] sm:$0xff]
      %v407 = vld [vmem:[%s2 + $0x18] sm:$0xff]
      %409 = vset.pattern.permute.xlu0 0
      %410 = vperm.xlu0 %409, %v404
      %v411 = vpop.permute.xlu0 %410
      %414 = vset.pattern.permute.xlu0 0
      %415 = vperm.xlu0 %414, %v405
      %v416 = vpop.permute.xlu0 %415
      %419 = vset.pattern.permute.xlu0 0
      %420 = vperm.xlu0 %419, %v406
      %v421 = vpop.permute.xlu0 %420
      %424 = vset.pattern.permute.xlu0 0
      %425 = vperm.xlu0 %424, %v407
      %v426 = vpop.permute.xlu0 %425
      %vm428 = vcmask 252928
      %v430 = vsel %vm428, %v400, 0
      %v433 = vsel %vm428, %v401, 0
      %v436 = vsel %vm428, %v402, 0
      %v439 = vsel %vm428, %v403, 0
      %v442 = vsel %vm428, %v336, 0
      %v445 = vsel %vm428, %v337, 0
      %v448 = vsel %vm428, %v338, 0
      %v451 = vsel %vm428, %v339, 0
      %v454 = vsel %vm428, %v340, 0
      %v457 = vsel %vm428, %v341, 0
      %v460 = vsel %vm428, %v342, 0
      %v463 = vsel %vm428, %v343, 0
      %v466 = vsel %vm428, %v344, 0
      %v469 = vsel %vm428, %v345, 0
      %v472 = vsel %vm428, %v346, 0
      %v475 = vsel %vm428, %v347, 0
      %v478 = vsel %vm428, %v348, 0
      %v481 = vsel %vm428, %v349, 0
      %v484 = vsel %vm428, %v350, 0
      %v487 = vsel %vm428, %v351, 0
      %v490 = vsel %vm428, %v352, 0
      %v493 = vsel %vm428, %v353, 0
      %v496 = vsel %vm428, %v354, 0
      %v499 = vsel %vm428, %v355, 0
      %v502 = vsel %vm428, %v356, 0
      %v505 = vsel %vm428, %v357, 0
      %v508 = vsel %vm428, %v358, 0
      %v511 = vsel %vm428, %v359, 0
      %v514 = vsel %vm428, %v360, 0
      %v517 = vsel %vm428, %v361, 0
      %v520 = vsel %vm428, %v362, 0
      %v523 = vsel %vm428, %v363, 0
      %v526 = vsel %vm428, %v364, 0
      %v529 = vsel %vm428, %v365, 0
      %v532 = vsel %vm428, %v366, 0
      %v535 = vsel %vm428, %v367, 0
      %v538 = vsel %vm428, %v368, 0
      %v541 = vsel %vm428, %v369, 0
      %v544 = vsel %vm428, %v370, 0
      %v547 = vsel %vm428, %v371, 0
      %v550 = vsel %vm428, %v372, 0
      %v553 = vsel %vm428, %v373, 0
      %v556 = vsel %vm428, %v374, 0
      %v559 = vsel %vm428, %v375, 0
      %v562 = vsel %vm428, %v376, 0
      %v565 = vsel %vm428, %v377, 0
      %v568 = vsel %vm428, %v378, 0
      %v571 = vsel %vm428, %v379, 0
      %v574 = vsel %vm428, %v380, 0
      %v577 = vsel %vm428, %v381, 0
      %v580 = vsel %vm428, %v382, 0
      %v583 = vsel %vm428, %v383, 0
      %v586 = vsel %vm428, %v384, 0
      %v589 = vsel %vm428, %v385, 0
      %v592 = vsel %vm428, %v386, 0
      %v595 = vsel %vm428, %v387, 0
      %v598 = vsel %vm428, %v388, 0
      %v601 = vsel %vm428, %v389, 0
      %v604 = vsel %vm428, %v390, 0
      %v607 = vsel %vm428, %v391, 0
      %v610 = vsel %vm428, %v392, 0
      %v613 = vsel %vm428, %v393, 0
      %v616 = vsel %vm428, %v394, 0
      %v619 = vsel %vm428, %v395, 0
      %v622 = vsel %vm428, %v396, 0
      %v625 = vsel %vm428, %v397, 0
      %v628 = vsel %vm428, %v398, 0
      %v631 = vsel %vm428, %v399, 0
      %633 = vmatpush.xpose.msra.mxu0 %v487
      %634 = vmatpush.xpose.msra.mxu0 %v484
      %635 = vmatpush.xpose.msra.mxu0 %v481
      %636 = vmatpush.xpose.msra.mxu0 %v478
      %637 = vmatpush.xpose.msra.mxu0 %v475
      %638 = vmatpush.xpose.msra.mxu0 %v472
      %639 = vmatpush.xpose.msra.mxu0 %v469
      %640 = vmatpush.xpose.msra.mxu0 %v466
      %641 = vmatpush.xpose.msra.mxu0 %v463
      %642 = vmatpush.xpose.msra.mxu0 %v460
      %643 = vmatpush.xpose.msra.mxu0 %v457
      %644 = vmatpush.xpose.msra.mxu0 %v454
      %645 = vmatpush.xpose.msra.mxu0 %v451
      %646 = vmatpush.xpose.msra.mxu0 %v448
      %647 = vmatpush.xpose.msra.mxu0 %v445
      %648 = vmatpush.xpose.msra.mxu0 %v442
      %649 = vmatmul.f32.gmra.mxu0 %v430
      %v650 = vpop.f32.mrf.mxu0
      %v651 = vadd.f32 %v411, %v650
      %652 = vmatmul.f32.gmra.mxu0 %v433
      %v653 = vpop.f32.mrf.mxu0
      %v654 = vadd.f32 %v416, %v653
      %655 = vmatmul.f32.gmra.mxu0 %v436
      %v656 = vpop.f32.mrf.mxu0
      %v657 = vadd.f32 %v421, %v656
      %658 = vmatmul.f32.gmra.mxu0 %v439
      %v659 = vpop.f32.mrf.mxu0
      %v660 = vadd.f32 %v426, %v659
      %661 = vdwg.mxu0
      %662 = vmatpush.xpose.msra.mxu0 %v535
      %663 = vmatpush.xpose.msra.mxu0 %v532
      %664 = vmatpush.xpose.msra.mxu0 %v529
      %665 = vmatpush.xpose.msra.mxu0 %v526
      %666 = vmatpush.xpose.msra.mxu0 %v523
      %667 = vmatpush.xpose.msra.mxu0 %v520
      %668 = vmatpush.xpose.msra.mxu0 %v517
      %669 = vmatpush.xpose.msra.mxu0 %v514
      %670 = vmatpush.xpose.msra.mxu0 %v511
      %671 = vmatpush.xpose.msra.mxu0 %v508
      %672 = vmatpush.xpose.msra.mxu0 %v505
      %673 = vmatpush.xpose.msra.mxu0 %v502
      %674 = vmatpush.xpose.msra.mxu0 %v499
      %675 = vmatpush.xpose.msra.mxu0 %v496
      %676 = vmatpush.xpose.msra.mxu0 %v493
      %677 = vmatpush.xpose.msra.mxu0 %v490
      %678 = vmatmul.f32.gmra.mxu0 %v430
      %v679 = vpop.f32.mrf.mxu0
      %v680 = vadd.f32 %v411, %v679
      %681 = vmatmul.f32.gmra.mxu0 %v433
      %v682 = vpop.f32.mrf.mxu0
      %v683 = vadd.f32 %v416, %v682
      %684 = vmatmul.f32.gmra.mxu0 %v436
      %v685 = vpop.f32.mrf.mxu0
      %v686 = vadd.f32 %v421, %v685
      %687 = vmatmul.f32.gmra.mxu0 %v439
      %v688 = vpop.f32.mrf.mxu0
      %v689 = vadd.f32 %v426, %v688
      %690 = vdwg.mxu0
      %691 = vmatpush.xpose.msra.mxu0 %v583
      %692 = vmatpush.xpose.msra.mxu0 %v580
      %693 = vmatpush.xpose.msra.mxu0 %v577
      %694 = vmatpush.xpose.msra.mxu0 %v574
      %695 = vmatpush.xpose.msra.mxu0 %v571
      %696 = vmatpush.xpose.msra.mxu0 %v568
      %697 = vmatpush.xpose.msra.mxu0 %v565
      %698 = vmatpush.xpose.msra.mxu0 %v562
      %699 = vmatpush.xpose.msra.mxu0 %v559
      %700 = vmatpush.xpose.msra.mxu0 %v556
      %701 = vmatpush.xpose.msra.mxu0 %v553
      %702 = vmatpush.xpose.msra.mxu0 %v550
      %703 = vmatpush.xpose.msra.mxu0 %v547
      %704 = vmatpush.xpose.msra.mxu0 %v544
      %705 = vmatpush.xpose.msra.mxu0 %v541
      %706 = vmatpush.xpose.msra.mxu0 %v538
      %707 = vmatmul.f32.gmra.mxu0 %v430
      %v708 = vpop.f32.mrf.mxu0
      %v709 = vadd.f32 %v411, %v708
      %710 = vmatmul.f32.gmra.mxu0 %v433
      %v711 = vpop.f32.mrf.mxu0
      %v712 = vadd.f32 %v416, %v711
      %713 = vmatmul.f32.gmra.mxu0 %v436
      %v714 = vpop.f32.mrf.mxu0
      %v715 = vadd.f32 %v421, %v714
      %716 = vmatmul.f32.gmra.mxu0 %v439
      %v717 = vpop.f32.mrf.mxu0
      %v718 = vadd.f32 %v426, %v717
      %719 = vdwg.mxu0
      %720 = vmatpush.xpose.msra.mxu0 %v631
      %721 = vmatpush.xpose.msra.mxu0 %v628
      %722 = vmatpush.xpose.msra.mxu0 %v625
      %723 = vmatpush.xpose.msra.mxu0 %v622
      %724 = vmatpush.xpose.msra.mxu0 %v619
      %725 = vmatpush.xpose.msra.mxu0 %v616
      %726 = vmatpush.xpose.msra.mxu0 %v613
      %727 = vmatpush.xpose.msra.mxu0 %v610
      %728 = vmatpush.xpose.msra.mxu0 %v607
      %729 = vmatpush.xpose.msra.mxu0 %v604
      %730 = vmatpush.xpose.msra.mxu0 %v601
      %731 = vmatpush.xpose.msra.mxu0 %v598
      %732 = vmatpush.xpose.msra.mxu0 %v595
      %733 = vmatpush.xpose.msra.mxu0 %v592
      %734 = vmatpush.xpose.msra.mxu0 %v589
      %735 = vmatpush.xpose.msra.mxu0 %v586
      %736 = vmatmul.f32.gmra.mxu0 %v430
      %v737 = vpop.f32.mrf.mxu0
      %v738 = vadd.f32 %v411, %v737
      %739 = vmatmul.f32.gmra.mxu0 %v433
      %v740 = vpop.f32.mrf.mxu0
      %v741 = vadd.f32 %v416, %v740
      %742 = vmatmul.f32.gmra.mxu0 %v436
      %v743 = vpop.f32.mrf.mxu0
      %v744 = vadd.f32 %v421, %v743
      %745 = vmatmul.f32.gmra.mxu0 %v439
      %v746 = vpop.f32.mrf.mxu0
      %v747 = vadd.f32 %v426, %v746
      %748 = vdwg.mxu0
      %v749 = vmax.f32 %v651, 0.0
      %v750 = vmax.f32 %v680, 0.0
      %v751 = vmax.f32 %v709, 0.0
      %v752 = vmax.f32 %v738, 0.0
      %v753 = vmax.f32 %v654, 0.0
      %v754 = vmax.f32 %v683, 0.0
      %v755 = vmax.f32 %v712, 0.0
      %v756 = vmax.f32 %v741, 0.0
      %v757 = vmax.f32 %v657, 0.0
      %v758 = vmax.f32 %v686, 0.0
      %v759 = vmax.f32 %v715, 0.0
      %v760 = vmax.f32 %v744, 0.0
      %v761 = vmax.f32 %v660, 0.0
      %v762 = vmax.f32 %v689, 0.0
      %v763 = vmax.f32 %v718, 0.0
      %v764 = vmax.f32 %v747, 0.0
      %v765 = vld [vmem:[%s3] sm:$0xff]
      %v766 = vld [vmem:[%s3 + $0x8] sm:$0xff]
      %v767 = vld [vmem:[%s3 + $0x10] sm:$0xff]
      %v768 = vld [vmem:[%s3 + $0x18] sm:$0xff]
      %v769 = vld [vmem:[%s4] sm:$0xff]
      %v770 = vld [vmem:[%s4 + $0x8] sm:$0xff]
      %v771 = vld [vmem:[%s4 + $0x10] sm:$0xff]
      %v772 = vld [vmem:[%s4 + $0x18] sm:$0xff]
      %774 = vset.pattern.permute.xlu0 0
      %775 = vperm.xlu0 %774, %v769
      %v776 = vpop.permute.xlu0 %775
      %779 = vset.pattern.permute.xlu0 0
      %780 = vperm.xlu0 %779, %v770
      %v781 = vpop.permute.xlu0 %780
      %784 = vset.pattern.permute.xlu0 0
      %785 = vperm.xlu0 %784, %v771
      %v786 = vpop.permute.xlu0 %785
      %789 = vset.pattern.permute.xlu0 0
      %790 = vperm.xlu0 %789, %v772
      %v791 = vpop.permute.xlu0 %790
      %vm793 = vcmask 261120
      %v795 = vsel %vm793, %v765, 0
      %v798 = vsel %vm793, %v766, 0
      %v801 = vsel %vm793, %v767, 0
      %v804 = vsel %vm793, %v768, 0
      %806 = vmatpush.msra.mxu0 0.0
      %807 = vmatpush.msra.mxu0 0.0
      %808 = vmatpush.msra.mxu0 0.0
      %809 = vmatpush.msra.mxu0 0.0
      %810 = vmatpush.msra.mxu0 0.0
      %811 = vmatpush.msra.mxu0 0.0
      %812 = vmatpush.msra.mxu0 0.0
      %813 = vmatpush.msra.mxu0 0.0
      %814 = vmatpush.msra.mxu0 0.0
      %815 = vmatpush.msra.mxu0 0.0
      %816 = vmatpush.msra.mxu0 0.0
      %817 = vmatpush.msra.mxu0 0.0
      %818 = vmatpush.msra.mxu0 %v761
      %819 = vmatpush.msra.mxu0 %v757
      %820 = vmatpush.msra.mxu0 %v753
      %821 = vmatpush.msra.mxu0 %v749
      %822 = vmatmul.f32.gmra.mxu0 %v795
      %v823 = vpop.f32.mrf.mxu0
      %v824 = vadd.f32 %v776, %v823
      %825 = vmatmul.f32.gmra.mxu0 %v798
      %v826 = vpop.f32.mrf.mxu0
      %v827 = vadd.f32 %v781, %v826
      %828 = vmatmul.f32.gmra.mxu0 %v801
      %v829 = vpop.f32.mrf.mxu0
      %v830 = vadd.f32 %v786, %v829
      %831 = vmatmul.f32.gmra.mxu0 %v804
      %v832 = vpop.f32.mrf.mxu0
      %v833 = vadd.f32 %v791, %v832
      %834 = vdwg.mxu0
      %835 = vmatpush.msra.mxu0 0.0
      %836 = vmatpush.msra.mxu0 0.0
      %837 = vmatpush.msra.mxu0 0.0
      %838 = vmatpush.msra.mxu0 0.0
      %839 = vmatpush.msra.mxu0 0.0
      %840 = vmatpush.msra.mxu0 0.0
      %841 = vmatpush.msra.mxu0 0.0
      %842 = vmatpush.msra.mxu0 0.0
      %843 = vmatpush.msra.mxu0 0.0
      %844 = vmatpush.msra.mxu0 0.0
      %845 = vmatpush.msra.mxu0 0.0
      %846 = vmatpush.msra.mxu0 0.0
      %847 = vmatpush.msra.mxu0 %v762
      %848 = vmatpush.msra.mxu0 %v758
      %849 = vmatpush.msra.mxu0 %v754
      %850 = vmatpush.msra.mxu0 %v750
      %851 = vmatmul.f32.gmra.mxu0 %v795
      %v852 = vpop.f32.mrf.mxu0
      %v853 = vadd.f32 %v776, %v852
      %854 = vmatmul.f32.gmra.mxu0 %v798
      %v855 = vpop.f32.mrf.mxu0
      %v856 = vadd.f32 %v781, %v855
      %857 = vmatmul.f32.gmra.mxu0 %v801
      %v858 = vpop.f32.mrf.mxu0
      %v859 = vadd.f32 %v786, %v858
      %860 = vmatmul.f32.gmra.mxu0 %v804
      %v861 = vpop.f32.mrf.mxu0
      %v862 = vadd.f32 %v791, %v861
      %863 = vdwg.mxu0
      %864 = vmatpush.msra.mxu0 0.0
      %865 = vmatpush.msra.mxu0 0.0
      %866 = vmatpush.msra.mxu0 0.0
      %867 = vmatpush.msra.mxu0 0.0
      %868 = vmatpush.msra.mxu0 0.0
      %869 = vmatpush.msra.mxu0 0.0
      %870 = vmatpush.msra.mxu0 0.0
      %871 = vmatpush.msra.mxu0 0.0
      %872 = vmatpush.msra.mxu0 0.0
      %873 = vmatpush.msra.mxu0 0.0
      %874 = vmatpush.msra.mxu0 0.0
      %875 = vmatpush.msra.mxu0 0.0
      %876 = vmatpush.msra.mxu0 %v763
      %877 = vmatpush.msra.mxu0 %v759
      %878 = vmatpush.msra.mxu0 %v755
      %879 = vmatpush.msra.mxu0 %v751
      %880 = vmatmul.f32.gmra.mxu0 %v795
      %v881 = vpop.f32.mrf.mxu0
      %v882 = vadd.f32 %v776, %v881
      %883 = vmatmul.f32.gmra.mxu0 %v798
      %v884 = vpop.f32.mrf.mxu0
      %v885 = vadd.f32 %v781, %v884
      %886 = vmatmul.f32.gmra.mxu0 %v801
      %v887 = vpop.f32.mrf.mxu0
      %v888 = vadd.f32 %v786, %v887
      %889 = vmatmul.f32.gmra.mxu0 %v804
      %v890 = vpop.f32.mrf.mxu0
      %v891 = vadd.f32 %v791, %v890
      %892 = vdwg.mxu0
      %893 = vmatpush.msra.mxu0 0.0
      %894 = vmatpush.msra.mxu0 0.0
      %895 = vmatpush.msra.mxu0 0.0
      %896 = vmatpush.msra.mxu0 0.0
      %897 = vmatpush.msra.mxu0 0.0
      %898 = vmatpush.msra.mxu0 0.0
      %899 = vmatpush.msra.mxu0 0.0
      %900 = vmatpush.msra.mxu0 0.0
      %901 = vmatpush.msra.mxu0 0.0
      %902 = vmatpush.msra.mxu0 0.0
      %903 = vmatpush.msra.mxu0 0.0
      %904 = vmatpush.msra.mxu0 0.0
      %905 = vmatpush.msra.mxu0 %v764
      %906 = vmatpush.msra.mxu0 %v760
      %907 = vmatpush.msra.mxu0 %v756
      %908 = vmatpush.msra.mxu0 %v752
      %909 = vmatmul.f32.gmra.mxu0 %v795
      %v910 = vpop.f32.mrf.mxu0
      %v911 = vadd.f32 %v776, %v910
      %912 = vmatmul.f32.gmra.mxu0 %v798
      %v913 = vpop.f32.mrf.mxu0
      %v914 = vadd.f32 %v781, %v913
      %915 = vmatmul.f32.gmra.mxu0 %v801
      %v916 = vpop.f32.mrf.mxu0
      %v917 = vadd.f32 %v786, %v916
      %918 = vmatmul.f32.gmra.mxu0 %v804
      %v919 = vpop.f32.mrf.mxu0
      %v920 = vadd.f32 %v791, %v919
      %921 = vdwg.mxu0
      %v922 = vmax.f32 %v824, 0.0
      %v923 = vmax.f32 %v853, 0.0
      %v924 = vmax.f32 %v882, 0.0
      %v925 = vmax.f32 %v911, 0.0
      %v926 = vmax.f32 %v827, 0.0
      %v927 = vmax.f32 %v856, 0.0
      %v928 = vmax.f32 %v885, 0.0
      %v929 = vmax.f32 %v914, 0.0
      %v930 = vmax.f32 %v830, 0.0
      %v931 = vmax.f32 %v859, 0.0
      %v932 = vmax.f32 %v888, 0.0
      %v933 = vmax.f32 %v917, 0.0
      %v934 = vmax.f32 %v833, 0.0
      %v935 = vmax.f32 %v862, 0.0
      %v936 = vmax.f32 %v891, 0.0
      %v937 = vmax.f32 %v920, 0.0
      %v938 = vld [vmem:[%s5] sm:$0xff]
      %v939 = vld [vmem:[%s5 + $0x8] sm:$0xff]
      %v940 = vld [vmem:[%s5 + $0x10] sm:$0xff]
      %v941 = vld [vmem:[%s5 + $0x18] sm:$0xff]
      %v942 = vld [vmem:[%s6] sm:$0xff]
      %v943 = vld [vmem:[%s6 + $0x8] sm:$0xff]
      %v944 = vld [vmem:[%s6 + $0x10] sm:$0xff]
      %v945 = vld [vmem:[%s6 + $0x18] sm:$0xff]
      %947 = vset.pattern.permute.xlu0 0
      %948 = vperm.xlu0 %947, %v942
      %v949 = vpop.permute.xlu0 %948
      %952 = vset.pattern.permute.xlu0 0
      %953 = vperm.xlu0 %952, %v943
      %v954 = vpop.permute.xlu0 %953
      %957 = vset.pattern.permute.xlu0 0
      %958 = vperm.xlu0 %957, %v944
      %v959 = vpop.permute.xlu0 %958
      %962 = vset.pattern.permute.xlu0 0
      %963 = vperm.xlu0 %962, %v945
      %v964 = vpop.permute.xlu0 %963
      %v967 = vsel %vm793, %v938, 0
      %v970 = vsel %vm793, %v939, 0
      %v973 = vsel %vm793, %v940, 0
      %v976 = vsel %vm793, %v941, 0
      %978 = vmatpush.msra.mxu0 0.0
      %979 = vmatpush.msra.mxu0 0.0
      %980 = vmatpush.msra.mxu0 0.0
      %981 = vmatpush.msra.mxu0 0.0
      %982 = vmatpush.msra.mxu0 0.0
      %983 = vmatpush.msra.mxu0 0.0
      %984 = vmatpush.msra.mxu0 0.0
      %985 = vmatpush.msra.mxu0 0.0
      %986 = vmatpush.msra.mxu0 0.0
      %987 = vmatpush.msra.mxu0 0.0
      %988 = vmatpush.msra.mxu0 0.0
      %989 = vmatpush.msra.mxu0 0.0
      %990 = vmatpush.msra.mxu0 %v934
      %991 = vmatpush.msra.mxu0 %v930
      %992 = vmatpush.msra.mxu0 %v926
      %993 = vmatpush.msra.mxu0 %v922
      %994 = vmatmul.f32.gmra.mxu0 %v967
      %v995 = vpop.f32.mrf.mxu0
      %v996 = vadd.f32 %v949, %v995
      %997 = vmatmul.f32.gmra.mxu0 %v970
      %v998 = vpop.f32.mrf.mxu0
      %v999 = vadd.f32 %v954, %v998
      %1000 = vmatmul.f32.gmra.mxu0 %v973
      %v1001 = vpop.f32.mrf.mxu0
      %v1002 = vadd.f32 %v959, %v1001
      %1003 = vmatmul.f32.gmra.mxu0 %v976
      %v1004 = vpop.f32.mrf.mxu0
      %v1005 = vadd.f32 %v964, %v1004
      %1006 = vdwg.mxu0
      %1007 = vmatpush.msra.mxu0 0.0
      %1008 = vmatpush.msra.mxu0 0.0
      %1009 = vmatpush.msra.mxu0 0.0
      %1010 = vmatpush.msra.mxu0 0.0
      %1011 = vmatpush.msra.mxu0 0.0
      %1012 = vmatpush.msra.mxu0 0.0
      %1013 = vmatpush.msra.mxu0 0.0
      %1014 = vmatpush.msra.mxu0 0.0
      %1015 = vmatpush.msra.mxu0 0.0
      %1016 = vmatpush.msra.mxu0 0.0
      %1017 = vmatpush.msra.mxu0 0.0
      %1018 = vmatpush.msra.mxu0 0.0
      %1019 = vmatpush.msra.mxu0 %v935
      %1020 = vmatpush.msra.mxu0 %v931
      %1021 = vmatpush.msra.mxu0 %v927
      %1022 = vmatpush.msra.mxu0 %v923
      %1023 = vmatmul.f32.gmra.mxu0 %v967
      %v1024 = vpop.f32.mrf.mxu0
      %v1025 = vadd.f32 %v949, %v1024
      %1026 = vmatmul.f32.gmra.mxu0 %v970
      %v1027 = vpop.f32.mrf.mxu0
      %v1028 = vadd.f32 %v954, %v1027
      %1029 = vmatmul.f32.gmra.mxu0 %v973
      %v1030 = vpop.f32.mrf.mxu0
      %v1031 = vadd.f32 %v959, %v1030
      %1032 = vmatmul.f32.gmra.mxu0 %v976
      %v1033 = vpop.f32.mrf.mxu0
      %v1034 = vadd.f32 %v964, %v1033
      %1035 = vdwg.mxu0
      %1036 = vmatpush.msra.mxu0 0.0
      %1037 = vmatpush.msra.mxu0 0.0
      %1038 = vmatpush.msra.mxu0 0.0
      %1039 = vmatpush.msra.mxu0 0.0
      %1040 = vmatpush.msra.mxu0 0.0
      %1041 = vmatpush.msra.mxu0 0.0
      %1042 = vmatpush.msra.mxu0 0.0
      %1043 = vmatpush.msra.mxu0 0.0
      %1044 = vmatpush.msra.mxu0 0.0
      %1045 = vmatpush.msra.mxu0 0.0
      %1046 = vmatpush.msra.mxu0 0.0
      %1047 = vmatpush.msra.mxu0 0.0
      %1048 = vmatpush.msra.mxu0 %v936
      %1049 = vmatpush.msra.mxu0 %v932
      %1050 = vmatpush.msra.mxu0 %v928
      %1051 = vmatpush.msra.mxu0 %v924
      %1052 = vmatmul.f32.gmra.mxu0 %v967
      %v1053 = vpop.f32.mrf.mxu0
      %v1054 = vadd.f32 %v949, %v1053
      %1055 = vmatmul.f32.gmra.mxu0 %v970
      %v1056 = vpop.f32.mrf.mxu0
      %v1057 = vadd.f32 %v954, %v1056
      %1058 = vmatmul.f32.gmra.mxu0 %v973
      %v1059 = vpop.f32.mrf.mxu0
      %v1060 = vadd.f32 %v959, %v1059
      %1061 = vmatmul.f32.gmra.mxu0 %v976
      %v1062 = vpop.f32.mrf.mxu0
      %v1063 = vadd.f32 %v964, %v1062
      %1064 = vdwg.mxu0
      %1065 = vmatpush.msra.mxu0 0.0
      %1066 = vmatpush.msra.mxu0 0.0
      %1067 = vmatpush.msra.mxu0 0.0
      %1068 = vmatpush.msra.mxu0 0.0
      %1069 = vmatpush.msra.mxu0 0.0
      %1070 = vmatpush.msra.mxu0 0.0
      %1071 = vmatpush.msra.mxu0 0.0
      %1072 = vmatpush.msra.mxu0 0.0
      %1073 = vmatpush.msra.mxu0 0.0
      %1074 = vmatpush.msra.mxu0 0.0
      %1075 = vmatpush.msra.mxu0 0.0
      %1076 = vmatpush.msra.mxu0 0.0
      %1077 = vmatpush.msra.mxu0 %v937
      %1078 = vmatpush.msra.mxu0 %v933
      %1079 = vmatpush.msra.mxu0 %v929
      %1080 = vmatpush.msra.mxu0 %v925
      %1081 = vmatmul.f32.gmra.mxu0 %v967
      %v1082 = vpop.f32.mrf.mxu0
      %v1083 = vadd.f32 %v949, %v1082
      %1084 = vmatmul.f32.gmra.mxu0 %v970
      %v1085 = vpop.f32.mrf.mxu0
      %v1086 = vadd.f32 %v954, %v1085
      %1087 = vmatmul.f32.gmra.mxu0 %v973
      %v1088 = vpop.f32.mrf.mxu0
      %v1089 = vadd.f32 %v959, %v1088
      %1090 = vmatmul.f32.gmra.mxu0 %v976
      %v1091 = vpop.f32.mrf.mxu0
      %v1092 = vadd.f32 %v964, %v1091
      %1093 = vdwg.mxu0
      %v1094 = vmax.f32 %v996, 0.0
      %v1095 = vmax.f32 %v1025, 0.0
      %v1096 = vmax.f32 %v1054, 0.0
      %v1097 = vmax.f32 %v1083, 0.0
      %v1098 = vmax.f32 %v999, 0.0
      %v1099 = vmax.f32 %v1028, 0.0
      %v1100 = vmax.f32 %v1057, 0.0
      %v1101 = vmax.f32 %v1086, 0.0
      %v1102 = vmax.f32 %v1002, 0.0
      %v1103 = vmax.f32 %v1031, 0.0
      %v1104 = vmax.f32 %v1060, 0.0
      %v1105 = vmax.f32 %v1089, 0.0
      %v1106 = vmax.f32 %v1005, 0.0
      %v1107 = vmax.f32 %v1034, 0.0
      %v1108 = vmax.f32 %v1063, 0.0
      %v1109 = vmax.f32 %v1092, 0.0
      %v1110 = vld [vmem:[%s7] sm:$0xff]
      %v1111 = vld [vmem:[%s7 + $0x8] sm:$0xff]
      %v1112 = vld [vmem:[%s7 + $0x10] sm:$0xff]
      %v1113 = vld [vmem:[%s7 + $0x18] sm:$0xff]
      %v1114 = vld [vmem:[%s8] sm:$0x1]
      %v1116 = vperm.slane %v1114, 0
      %1118 = vxpose.xlu0.b32.start [1/16] %v1094, 128
      %1119 = vxpose.xlu0.b32.cont [2/16] %v1098, 128
      %1120 = vxpose.xlu0.b32.cont [3/16] %v1102, 128
      %1121 = vxpose.xlu0.b32.cont [4/16] %v1106, 128
      %1122 = vxpose.xlu0.b32.cont [5/16] 0.0, 128
      %1123 = vxpose.xlu0.b32.cont [6/16] 0.0, 128
      %1124 = vxpose.xlu0.b32.cont [7/16] 0.0, 128
      %1125 = vxpose.xlu0.b32.cont [8/16] 0.0, 128
      %1126 = vxpose.xlu0.b32.cont [9/16] 0.0, 128
      %1127 = vxpose.xlu0.b32.cont [10/16] 0.0, 128
      %1128 = vxpose.xlu0.b32.cont [11/16] 0.0, 128
      %1129 = vxpose.xlu0.b32.cont [12/16] 0.0, 128
      %1130 = vxpose.xlu0.b32.cont [13/16] 0.0, 128
      %1131 = vxpose.xlu0.b32.cont [14/16] 0.0, 128
      %1132 = vxpose.xlu0.b32.cont [15/16] 0.0, 128
      %1133 = vxpose.xlu0.b32.end [16/16] 0.0, 128
      %v1134 = vpop.trf.xlu0
      %v1135 = vpop.trf.xlu0
      %v1136 = vpop.trf.xlu0
      %v1137 = vpop.trf.xlu0
      %v1138 = vpop.trf.xlu0
      %v1139 = vpop.trf.xlu0
      %v1140 = vpop.trf.xlu0
      %v1141 = vpop.trf.xlu0
      %v1142 = vpop.trf.xlu0
      %v1143 = vpop.trf.xlu0
      %v1144 = vpop.trf.xlu0
      %v1145 = vpop.trf.xlu0
      %v1146 = vpop.trf.xlu0
      %v1147 = vpop.trf.xlu0
      %v1148 = vpop.trf.xlu0
      %v1149 = vpop.trf.xlu0
      %1150 = vxpose.xlu0.b32.start [1/16] %v1095, 128
      %1151 = vxpose.xlu0.b32.cont [2/16] %v1099, 128
      %1152 = vxpose.xlu0.b32.cont [3/16] %v1103, 128
      %1153 = vxpose.xlu0.b32.cont [4/16] %v1107, 128
      %1154 = vxpose.xlu0.b32.cont [5/16] 0.0, 128
      %1155 = vxpose.xlu0.b32.cont [6/16] 0.0, 128
      %1156 = vxpose.xlu0.b32.cont [7/16] 0.0, 128
      %1157 = vxpose.xlu0.b32.cont [8/16] 0.0, 128
      %1158 = vxpose.xlu0.b32.cont [9/16] 0.0, 128
      %1159 = vxpose.xlu0.b32.cont [10/16] 0.0, 128
      %1160 = vxpose.xlu0.b32.cont [11/16] 0.0, 128
      %1161 = vxpose.xlu0.b32.cont [12/16] 0.0, 128
      %1162 = vxpose.xlu0.b32.cont [13/16] 0.0, 128
      %1163 = vxpose.xlu0.b32.cont [14/16] 0.0, 128
      %1164 = vxpose.xlu0.b32.cont [15/16] 0.0, 128
      %1165 = vxpose.xlu0.b32.end [16/16] 0.0, 128
      %v1166 = vpop.trf.xlu0
      %v1167 = vpop.trf.xlu0
      %v1168 = vpop.trf.xlu0
      %v1169 = vpop.trf.xlu0
      %v1170 = vpop.trf.xlu0
      %v1171 = vpop.trf.xlu0
      %v1172 = vpop.trf.xlu0
      %v1173 = vpop.trf.xlu0
      %v1174 = vpop.trf.xlu0
      %v1175 = vpop.trf.xlu0
      %v1176 = vpop.trf.xlu0
      %v1177 = vpop.trf.xlu0
      %v1178 = vpop.trf.xlu0
      %v1179 = vpop.trf.xlu0
      %v1180 = vpop.trf.xlu0
      %v1181 = vpop.trf.xlu0
      %1182 = vxpose.xlu0.b32.start [1/16] %v1096, 128
      %1183 = vxpose.xlu0.b32.cont [2/16] %v1100, 128
      %1184 = vxpose.xlu0.b32.cont [3/16] %v1104, 128
      %1185 = vxpose.xlu0.b32.cont [4/16] %v1108, 128
      %1186 = vxpose.xlu0.b32.cont [5/16] 0.0, 128
      %1187 = vxpose.xlu0.b32.cont [6/16] 0.0, 128
      %1188 = vxpose.xlu0.b32.cont [7/16] 0.0, 128
      %1189 = vxpose.xlu0.b32.cont [8/16] 0.0, 128
      %1190 = vxpose.xlu0.b32.cont [9/16] 0.0, 128
      %1191 = vxpose.xlu0.b32.cont [10/16] 0.0, 128
      %1192 = vxpose.xlu0.b32.cont [11/16] 0.0, 128
      %1193 = vxpose.xlu0.b32.cont [12/16] 0.0, 128
      %1194 = vxpose.xlu0.b32.cont [13/16] 0.0, 128
      %1195 = vxpose.xlu0.b32.cont [14/16] 0.0, 128
      %1196 = vxpose.xlu0.b32.cont [15/16] 0.0, 128
      %1197 = vxpose.xlu0.b32.end [16/16] 0.0, 128
      %v1198 = vpop.trf.xlu0
      %v1199 = vpop.trf.xlu0
      %v1200 = vpop.trf.xlu0
      %v1201 = vpop.trf.xlu0
      %v1202 = vpop.trf.xlu0
      %v1203 = vpop.trf.xlu0
      %v1204 = vpop.trf.xlu0
      %v1205 = vpop.trf.xlu0
      %v1206 = vpop.trf.xlu0
      %v1207 = vpop.trf.xlu0
      %v1208 = vpop.trf.xlu0
      %v1209 = vpop.trf.xlu0
      %v1210 = vpop.trf.xlu0
      %v1211 = vpop.trf.xlu0
      %v1212 = vpop.trf.xlu0
      %v1213 = vpop.trf.xlu0
      %1214 = vxpose.xlu0.b32.start [1/16] %v1097, 128
      %1215 = vxpose.xlu0.b32.cont [2/16] %v1101, 128
      %1216 = vxpose.xlu0.b32.cont [3/16] %v1105, 128
      %1217 = vxpose.xlu0.b32.cont [4/16] %v1109, 128
      %1218 = vxpose.xlu0.b32.cont [5/16] 0.0, 128
      %1219 = vxpose.xlu0.b32.cont [6/16] 0.0, 128
      %1220 = vxpose.xlu0.b32.cont [7/16] 0.0, 128
      %1221 = vxpose.xlu0.b32.cont [8/16] 0.0, 128
      %1222 = vxpose.xlu0.b32.cont [9/16] 0.0, 128
      %1223 = vxpose.xlu0.b32.cont [10/16] 0.0, 128
      %1224 = vxpose.xlu0.b32.cont [11/16] 0.0, 128
      %1225 = vxpose.xlu0.b32.cont [12/16] 0.0, 128
      %1226 = vxpose.xlu0.b32.cont [13/16] 0.0, 128
      %1227 = vxpose.xlu0.b32.cont [14/16] 0.0, 128
      %1228 = vxpose.xlu0.b32.cont [15/16] 0.0, 128
      %1229 = vxpose.xlu0.b32.end [16/16] 0.0, 128
      %v1230 = vpop.trf.xlu0
      %v1231 = vpop.trf.xlu0
      %v1232 = vpop.trf.xlu0
      %v1233 = vpop.trf.xlu0
      %v1234 = vpop.trf.xlu0
      %v1235 = vpop.trf.xlu0
      %v1236 = vpop.trf.xlu0
      %v1237 = vpop.trf.xlu0
      %v1238 = vpop.trf.xlu0
      %v1239 = vpop.trf.xlu0
      %v1240 = vpop.trf.xlu0
      %v1241 = vpop.trf.xlu0
      %v1242 = vpop.trf.xlu0
      %v1243 = vpop.trf.xlu0
      %v1244 = vpop.trf.xlu0
      %v1245 = vpop.trf.xlu0
      %v1247 = vsel %vm793, %v1134, 0
      %v1250 = vsel %vm793, %v1135, 0
      %v1253 = vsel %vm793, %v1136, 0
      %v1256 = vsel %vm793, %v1137, 0
      %v1259 = vsel %vm793, %v1138, 0
      %v1262 = vsel %vm793, %v1139, 0
      %v1265 = vsel %vm793, %v1140, 0
      %v1268 = vsel %vm793, %v1141, 0
      %v1271 = vsel %vm793, %v1142, 0
      %v1274 = vsel %vm793, %v1143, 0
      %v1277 = vsel %vm793, %v1144, 0
      %v1280 = vsel %vm793, %v1145, 0
      %v1283 = vsel %vm793, %v1146, 0
      %v1286 = vsel %vm793, %v1147, 0
      %v1289 = vsel %vm793, %v1148, 0
      %v1292 = vsel %vm793, %v1149, 0
      %v1295 = vsel %vm793, %v1166, 0
      %v1298 = vsel %vm793, %v1167, 0
      %v1301 = vsel %vm793, %v1168, 0
      %v1304 = vsel %vm793, %v1169, 0
      %v1307 = vsel %vm793, %v1170, 0
      %v1310 = vsel %vm793, %v1171, 0
      %v1313 = vsel %vm793, %v1172, 0
      %v1316 = vsel %vm793, %v1173, 0
      %v1319 = vsel %vm793, %v1174, 0
      %v1322 = vsel %vm793, %v1175, 0
      %v1325 = vsel %vm793, %v1176, 0
      %v1328 = vsel %vm793, %v1177, 0
      %v1331 = vsel %vm793, %v1178, 0
      %v1334 = vsel %vm793, %v1179, 0
      %v1337 = vsel %vm793, %v1180, 0
      %v1340 = vsel %vm793, %v1181, 0
      %v1343 = vsel %vm793, %v1198, 0
      %v1346 = vsel %vm793, %v1199, 0
      %v1349 = vsel %vm793, %v1200, 0
      %v1352 = vsel %vm793, %v1201, 0
      %v1355 = vsel %vm793, %v1202, 0
      %v1358 = vsel %vm793, %v1203, 0
      %v1361 = vsel %vm793, %v1204, 0
      %v1364 = vsel %vm793, %v1205, 0
      %v1367 = vsel %vm793, %v1206, 0
      %v1370 = vsel %vm793, %v1207, 0
      %v1373 = vsel %vm793, %v1208, 0
      %v1376 = vsel %vm793, %v1209, 0
      %v1379 = vsel %vm793, %v1210, 0
      %v1382 = vsel %vm793, %v1211, 0
      %v1385 = vsel %vm793, %v1212, 0
      %v1388 = vsel %vm793, %v1213, 0
      %v1391 = vsel %vm793, %v1230, 0
      %v1394 = vsel %vm793, %v1231, 0
      %v1397 = vsel %vm793, %v1232, 0
      %v1400 = vsel %vm793, %v1233, 0
      %v1403 = vsel %vm793, %v1234, 0
      %v1406 = vsel %vm793, %v1235, 0
      %v1409 = vsel %vm793, %v1236, 0
      %v1412 = vsel %vm793, %v1237, 0
      %v1415 = vsel %vm793, %v1238, 0
      %v1418 = vsel %vm793, %v1239, 0
      %v1421 = vsel %vm793, %v1240, 0
      %v1424 = vsel %vm793, %v1241, 0
      %v1427 = vsel %vm793, %v1242, 0
      %v1430 = vsel %vm793, %v1243, 0
      %v1433 = vsel %vm793, %v1244, 0
      %v1436 = vsel %vm793, %v1245, 0
      %1438 = vmatpush.msra.mxu0 0.0
      %1439 = vmatpush.msra.mxu0 0.0
      %1440 = vmatpush.msra.mxu0 0.0
      %1441 = vmatpush.msra.mxu0 0.0
      %1442 = vmatpush.msra.mxu0 0.0
      %1443 = vmatpush.msra.mxu0 0.0
      %1444 = vmatpush.msra.mxu0 0.0
      %1445 = vmatpush.msra.mxu0 0.0
      %1446 = vmatpush.msra.mxu0 0.0
      %1447 = vmatpush.msra.mxu0 0.0
      %1448 = vmatpush.msra.mxu0 0.0
      %1449 = vmatpush.msra.mxu0 0.0
      %1450 = vmatpush.msra.mxu0 %v1113
      %1451 = vmatpush.msra.mxu0 %v1112
      %1452 = vmatpush.msra.mxu0 %v1111
      %1453 = vmatpush.msra.mxu0 %v1110
      %1454 = vmatmul.f32.gmra.mxu0 %v1247
      %v1455 = vpop.f32.mrf.mxu0
      %v1456 = vadd.f32 %v1116, %v1455
      %1457 = vmatmul.f32.gmra.mxu0 %v1250
      %v1458 = vpop.f32.mrf.mxu0
      %v1459 = vadd.f32 %v1116, %v1458
      %1460 = vmatmul.f32.gmra.mxu0 %v1253
      %v1461 = vpop.f32.mrf.mxu0
      %v1462 = vadd.f32 %v1116, %v1461
      %1463 = vmatmul.f32.gmra.mxu0 %v1256
      %v1464 = vpop.f32.mrf.mxu0
      %v1465 = vadd.f32 %v1116, %v1464
      %1466 = vmatmul.f32.gmra.mxu0 %v1259
      %v1467 = vpop.f32.mrf.mxu0
      %v1468 = vadd.f32 %v1116, %v1467
      %1469 = vmatmul.f32.gmra.mxu0 %v1262
      %v1470 = vpop.f32.mrf.mxu0
      %v1471 = vadd.f32 %v1116, %v1470
      %1472 = vmatmul.f32.gmra.mxu0 %v1265
      %v1473 = vpop.f32.mrf.mxu0
      %v1474 = vadd.f32 %v1116, %v1473
      %1475 = vmatmul.f32.gmra.mxu0 %v1268
      %v1476 = vpop.f32.mrf.mxu0
      %v1477 = vadd.f32 %v1116, %v1476
      %1478 = vmatmul.f32.gmra.mxu0 %v1271
      %v1479 = vpop.f32.mrf.mxu0
      %v1480 = vadd.f32 %v1116, %v1479
      %1481 = vmatmul.f32.gmra.mxu0 %v1274
      %v1482 = vpop.f32.mrf.mxu0
      %v1483 = vadd.f32 %v1116, %v1482
      %1484 = vmatmul.f32.gmra.mxu0 %v1277
      %v1485 = vpop.f32.mrf.mxu0
      %v1486 = vadd.f32 %v1116, %v1485
      %1487 = vmatmul.f32.gmra.mxu0 %v1280
      %v1488 = vpop.f32.mrf.mxu0
      %v1489 = vadd.f32 %v1116, %v1488
      %1490 = vmatmul.f32.gmra.mxu0 %v1283
      %v1491 = vpop.f32.mrf.mxu0
      %v1492 = vadd.f32 %v1116, %v1491
      %1493 = vmatmul.f32.gmra.mxu0 %v1286
      %v1494 = vpop.f32.mrf.mxu0
      %v1495 = vadd.f32 %v1116, %v1494
      %1496 = vmatmul.f32.gmra.mxu0 %v1289
      %v1497 = vpop.f32.mrf.mxu0
      %v1498 = vadd.f32 %v1116, %v1497
      %1499 = vmatmul.f32.gmra.mxu0 %v1292
      %v1500 = vpop.f32.mrf.mxu0
      %v1501 = vadd.f32 %v1116, %v1500
      %1502 = vmatmul.f32.gmra.mxu0 %v1295
      %v1503 = vpop.f32.mrf.mxu0
      %v1504 = vadd.f32 %v1116, %v1503
      %1505 = vmatmul.f32.gmra.mxu0 %v1298
      %v1506 = vpop.f32.mrf.mxu0
      %v1507 = vadd.f32 %v1116, %v1506
      %1508 = vmatmul.f32.gmra.mxu0 %v1301
      %v1509 = vpop.f32.mrf.mxu0
      %v1510 = vadd.f32 %v1116, %v1509
      %1511 = vmatmul.f32.gmra.mxu0 %v1304
      %v1512 = vpop.f32.mrf.mxu0
      %v1513 = vadd.f32 %v1116, %v1512
      %1514 = vmatmul.f32.gmra.mxu0 %v1307
      %v1515 = vpop.f32.mrf.mxu0
      %v1516 = vadd.f32 %v1116, %v1515
      %1517 = vmatmul.f32.gmra.mxu0 %v1310
      %v1518 = vpop.f32.mrf.mxu0
      %v1519 = vadd.f32 %v1116, %v1518
      %1520 = vmatmul.f32.gmra.mxu0 %v1313
      %v1521 = vpop.f32.mrf.mxu0
      %v1522 = vadd.f32 %v1116, %v1521
      %1523 = vmatmul.f32.gmra.mxu0 %v1316
      %v1524 = vpop.f32.mrf.mxu0
      %v1525 = vadd.f32 %v1116, %v1524
      %1526 = vmatmul.f32.gmra.mxu0 %v1319
      %v1527 = vpop.f32.mrf.mxu0
      %v1528 = vadd.f32 %v1116, %v1527
      %1529 = vmatmul.f32.gmra.mxu0 %v1322
      %v1530 = vpop.f32.mrf.mxu0
      %v1531 = vadd.f32 %v1116, %v1530
      %1532 = vmatmul.f32.gmra.mxu0 %v1325
      %v1533 = vpop.f32.mrf.mxu0
      %v1534 = vadd.f32 %v1116, %v1533
      %1535 = vmatmul.f32.gmra.mxu0 %v1328
      %v1536 = vpop.f32.mrf.mxu0
      %v1537 = vadd.f32 %v1116, %v1536
      %1538 = vmatmul.f32.gmra.mxu0 %v1331
      %v1539 = vpop.f32.mrf.mxu0
      %v1540 = vadd.f32 %v1116, %v1539
      %1541 = vmatmul.f32.gmra.mxu0 %v1334
      %v1542 = vpop.f32.mrf.mxu0
      %v1543 = vadd.f32 %v1116, %v1542
      %1544 = vmatmul.f32.gmra.mxu0 %v1337
      %v1545 = vpop.f32.mrf.mxu0
      %v1546 = vadd.f32 %v1116, %v1545
      %1547 = vmatmul.f32.gmra.mxu0 %v1340
      %v1548 = vpop.f32.mrf.mxu0
      %v1549 = vadd.f32 %v1116, %v1548
      %1550 = vmatmul.f32.gmra.mxu0 %v1343
      %v1551 = vpop.f32.mrf.mxu0
      %v1552 = vadd.f32 %v1116, %v1551
      %1553 = vmatmul.f32.gmra.mxu0 %v1346
      %v1554 = vpop.f32.mrf.mxu0
      %v1555 = vadd.f32 %v1116, %v1554
      %1556 = vmatmul.f32.gmra.mxu0 %v1349
      %v1557 = vpop.f32.mrf.mxu0
      %v1558 = vadd.f32 %v1116, %v1557
      %1559 = vmatmul.f32.gmra.mxu0 %v1352
      %v1560 = vpop.f32.mrf.mxu0
      %v1561 = vadd.f32 %v1116, %v1560
      %1562 = vmatmul.f32.gmra.mxu0 %v1355
      %v1563 = vpop.f32.mrf.mxu0
      %v1564 = vadd.f32 %v1116, %v1563
      %1565 = vmatmul.f32.gmra.mxu0 %v1358
      %v1566 = vpop.f32.mrf.mxu0
      %v1567 = vadd.f32 %v1116, %v1566
      %1568 = vmatmul.f32.gmra.mxu0 %v1361
      %v1569 = vpop.f32.mrf.mxu0
      %v1570 = vadd.f32 %v1116, %v1569
      %1571 = vmatmul.f32.gmra.mxu0 %v1364
      %v1572 = vpop.f32.mrf.mxu0
      %v1573 = vadd.f32 %v1116, %v1572
      %1574 = vmatmul.f32.gmra.mxu0 %v1367
      %v1575 = vpop.f32.mrf.mxu0
      %v1576 = vadd.f32 %v1116, %v1575
      %1577 = vmatmul.f32.gmra.mxu0 %v1370
      %v1578 = vpop.f32.mrf.mxu0
      %v1579 = vadd.f32 %v1116, %v1578
      %1580 = vmatmul.f32.gmra.mxu0 %v1373
      %v1581 = vpop.f32.mrf.mxu0
      %v1582 = vadd.f32 %v1116, %v1581
      %1583 = vmatmul.f32.gmra.mxu0 %v1376
      %v1584 = vpop.f32.mrf.mxu0
      %v1585 = vadd.f32 %v1116, %v1584
      %1586 = vmatmul.f32.gmra.mxu0 %v1379
      %v1587 = vpop.f32.mrf.mxu0
      %v1588 = vadd.f32 %v1116, %v1587
      %1589 = vmatmul.f32.gmra.mxu0 %v1382
      %v1590 = vpop.f32.mrf.mxu0
      %v1591 = vadd.f32 %v1116, %v1590
      %1592 = vmatmul.f32.gmra.mxu0 %v1385
      %v1593 = vpop.f32.mrf.mxu0
      %v1594 = vadd.f32 %v1116, %v1593
      %1595 = vmatmul.f32.gmra.mxu0 %v1388
      %v1596 = vpop.f32.mrf.mxu0
      %v1597 = vadd.f32 %v1116, %v1596
      %1598 = vmatmul.f32.gmra.mxu0 %v1391
      %v1599 = vpop.f32.mrf.mxu0
      %v1600 = vadd.f32 %v1116, %v1599
      %1601 = vmatmul.f32.gmra.mxu0 %v1394
      %v1602 = vpop.f32.mrf.mxu0
      %v1603 = vadd.f32 %v1116, %v1602
      %1604 = vmatmul.f32.gmra.mxu0 %v1397
      %v1605 = vpop.f32.mrf.mxu0
      %v1606 = vadd.f32 %v1116, %v1605
      %1607 = vmatmul.f32.gmra.mxu0 %v1400
      %v1608 = vpop.f32.mrf.mxu0
      %v1609 = vadd.f32 %v1116, %v1608
      %1610 = vmatmul.f32.gmra.mxu0 %v1403
      %v1611 = vpop.f32.mrf.mxu0
      %v1612 = vadd.f32 %v1116, %v1611
      %1613 = vmatmul.f32.gmra.mxu0 %v1406
      %v1614 = vpop.f32.mrf.mxu0
      %v1615 = vadd.f32 %v1116, %v1614
      %1616 = vmatmul.f32.gmra.mxu0 %v1409
      %v1617 = vpop.f32.mrf.mxu0
      %v1618 = vadd.f32 %v1116, %v1617
      %1619 = vmatmul.f32.gmra.mxu0 %v1412
      %v1620 = vpop.f32.mrf.mxu0
      %v1621 = vadd.f32 %v1116, %v1620
      %1622 = vmatmul.f32.gmra.mxu0 %v1415
      %v1623 = vpop.f32.mrf.mxu0
      %v1624 = vadd.f32 %v1116, %v1623
      %1625 = vmatmul.f32.gmra.mxu0 %v1418
      %v1626 = vpop.f32.mrf.mxu0
      %v1627 = vadd.f32 %v1116, %v1626
      %1628 = vmatmul.f32.gmra.mxu0 %v1421
      %v1629 = vpop.f32.mrf.mxu0
      %v1630 = vadd.f32 %v1116, %v1629
      %1631 = vmatmul.f32.gmra.mxu0 %v1424
      %v1632 = vpop.f32.mrf.mxu0
      %v1633 = vadd.f32 %v1116, %v1632
      %1634 = vmatmul.f32.gmra.mxu0 %v1427
      %v1635 = vpop.f32.mrf.mxu0
      %v1636 = vadd.f32 %v1116, %v1635
      %1637 = vmatmul.f32.gmra.mxu0 %v1430
      %v1638 = vpop.f32.mrf.mxu0
      %v1639 = vadd.f32 %v1116, %v1638
      %1640 = vmatmul.f32.gmra.mxu0 %v1433
      %v1641 = vpop.f32.mrf.mxu0
      %v1642 = vadd.f32 %v1116, %v1641
      %1643 = vmatmul.f32.gmra.mxu0 %v1436
      %v1644 = vpop.f32.mrf.mxu0
      %v1645 = vadd.f32 %v1116, %v1644
      %1646 = vdwg.mxu0
      %v1647 = vmax.f32 %v1456, 0.0
      %v1648 = vmax.f32 %v1459, 0.0
      %v1649 = vmax.f32 %v1462, 0.0
      %v1650 = vmax.f32 %v1465, 0.0
      %v1651 = vmax.f32 %v1468, 0.0
      %v1652 = vmax.f32 %v1471, 0.0
      %v1653 = vmax.f32 %v1474, 0.0
      %v1654 = vmax.f32 %v1477, 0.0
      %v1655 = vmax.f32 %v1480, 0.0
      %v1656 = vmax.f32 %v1483, 0.0
      %v1657 = vmax.f32 %v1486, 0.0
      %v1658 = vmax.f32 %v1489, 0.0
      %v1659 = vmax.f32 %v1492, 0.0
      %v1660 = vmax.f32 %v1495, 0.0
      %v1661 = vmax.f32 %v1498, 0.0
      %v1662 = vmax.f32 %v1501, 0.0
      %v1663 = vmax.f32 %v1504, 0.0
      %v1664 = vmax.f32 %v1507, 0.0
      %v1665 = vmax.f32 %v1510, 0.0
      %v1666 = vmax.f32 %v1513, 0.0
      %v1667 = vmax.f32 %v1516, 0.0
      %v1668 = vmax.f32 %v1519, 0.0
      %v1669 = vmax.f32 %v1522, 0.0
      %v1670 = vmax.f32 %v1525, 0.0
      %v1671 = vmax.f32 %v1528, 0.0
      %v1672 = vmax.f32 %v1531, 0.0
      %v1673 = vmax.f32 %v1534, 0.0
      %v1674 = vmax.f32 %v1537, 0.0
      %v1675 = vmax.f32 %v1540, 0.0
      %v1676 = vmax.f32 %v1543, 0.0
      %v1677 = vmax.f32 %v1546, 0.0
      %v1678 = vmax.f32 %v1549, 0.0
      %v1679 = vmax.f32 %v1552, 0.0
      %v1680 = vmax.f32 %v1555, 0.0
      %v1681 = vmax.f32 %v1558, 0.0
      %v1682 = vmax.f32 %v1561, 0.0
      %v1683 = vmax.f32 %v1564, 0.0
      %v1684 = vmax.f32 %v1567, 0.0
      %v1685 = vmax.f32 %v1570, 0.0
      %v1686 = vmax.f32 %v1573, 0.0
      %v1687 = vmax.f32 %v1576, 0.0
      %v1688 = vmax.f32 %v1579, 0.0
      %v1689 = vmax.f32 %v1582, 0.0
      %v1690 = vmax.f32 %v1585, 0.0
      %v1691 = vmax.f32 %v1588, 0.0
      %v1692 = vmax.f32 %v1591, 0.0
      %v1693 = vmax.f32 %v1594, 0.0
      %v1694 = vmax.f32 %v1597, 0.0
      %v1695 = vmax.f32 %v1600, 0.0
      %v1696 = vmax.f32 %v1603, 0.0
      %v1697 = vmax.f32 %v1606, 0.0
      %v1698 = vmax.f32 %v1609, 0.0
      %v1699 = vmax.f32 %v1612, 0.0
      %v1700 = vmax.f32 %v1615, 0.0
      %v1701 = vmax.f32 %v1618, 0.0
      %v1702 = vmax.f32 %v1621, 0.0
      %v1703 = vmax.f32 %v1624, 0.0
      %v1704 = vmax.f32 %v1627, 0.0
      %v1705 = vmax.f32 %v1630, 0.0
      %v1706 = vmax.f32 %v1633, 0.0
      %v1707 = vmax.f32 %v1636, 0.0
      %v1708 = vmax.f32 %v1639, 0.0
      %v1709 = vmax.f32 %v1642, 0.0
      %v1710 = vmax.f32 %v1645, 0.0
      %1711 = vst.msk [vmem:[%s334] sm:$0xff] %vm428, %v1647
      %1712 = vst.msk [vmem:[%s334 + $0x8] sm:$0xff] %vm428, %v1648
      %1713 = vst.msk [vmem:[%s334 + $0x10] sm:$0xff] %vm428, %v1649
      %1714 = vst.msk [vmem:[%s334 + $0x18] sm:$0xff] %vm428, %v1650
      %1715 = vst.msk [vmem:[%s334 + $0x20] sm:$0xff] %vm428, %v1651
      %1716 = vst.msk [vmem:[%s334 + $0x28] sm:$0xff] %vm428, %v1652
      %1717 = vst.msk [vmem:[%s334 + $0x30] sm:$0xff] %vm428, %v1653
      %1718 = vst.msk [vmem:[%s334 + $0x38] sm:$0xff] %vm428, %v1654
      %1719 = vst.msk [vmem:[%s334 + $0x40] sm:$0xff] %vm428, %v1655
      %1720 = vst.msk [vmem:[%s334 + $0x48] sm:$0xff] %vm428, %v1656
      %1721 = vst.msk [vmem:[%s334 + $0x50] sm:$0xff] %vm428, %v1657
      %1722 = vst.msk [vmem:[%s334 + $0x58] sm:$0xff] %vm428, %v1658
      %1723 = vst.msk [vmem:[%s334 + $0x60] sm:$0xff] %vm428, %v1659
      %1724 = vst.msk [vmem:[%s334 + $0x68] sm:$0xff] %vm428, %v1660
      %1725 = vst.msk [vmem:[%s334 + $0x70] sm:$0xff] %vm428, %v1661
      %1726 = vst.msk [vmem:[%s334 + $0x78] sm:$0xff] %vm428, %v1662
      %1727 = vst.msk [vmem:[%s334 + $0x80] sm:$0xff] %vm428, %v1663
      %1728 = vst.msk [vmem:[%s334 + $0x88] sm:$0xff] %vm428, %v1664
      %1729 = vst.msk [vmem:[%s334 + $0x90] sm:$0xff] %vm428, %v1665
      %1730 = vst.msk [vmem:[%s334 + $0x98] sm:$0xff] %vm428, %v1666
      %1731 = vst.msk [vmem:[%s334 + $0xa0] sm:$0xff] %vm428, %v1667
      %1732 = vst.msk [vmem:[%s334 + $0xa8] sm:$0xff] %vm428, %v1668
      %1733 = vst.msk [vmem:[%s334 + $0xb0] sm:$0xff] %vm428, %v1669
      %1734 = vst.msk [vmem:[%s334 + $0xb8] sm:$0xff] %vm428, %v1670
      %1735 = vst.msk [vmem:[%s334 + $0xc0] sm:$0xff] %vm428, %v1671
      %1736 = vst.msk [vmem:[%s334 + $0xc8] sm:$0xff] %vm428, %v1672
      %1737 = vst.msk [vmem:[%s334 + $0xd0] sm:$0xff] %vm428, %v1673
      %1738 = vst.msk [vmem:[%s334 + $0xd8] sm:$0xff] %vm428, %v1674
      %1739 = vst.msk [vmem:[%s334 + $0xe0] sm:$0xff] %vm428, %v1675
      %1740 = vst.msk [vmem:[%s334 + $0xe8] sm:$0xff] %vm428, %v1676
      %1741 = vst.msk [vmem:[%s334 + $0xf0] sm:$0xff] %vm428, %v1677
      %1742 = vst.msk [vmem:[%s334 + $0xf8] sm:$0xff] %vm428, %v1678
      %1743 = vst.msk [vmem:[%s334 + $0x100] sm:$0xff] %vm428, %v1679
      %1744 = vst.msk [vmem:[%s334 + $0x108] sm:$0xff] %vm428, %v1680
      %1745 = vst.msk [vmem:[%s334 + $0x110] sm:$0xff] %vm428, %v1681
      %1746 = vst.msk [vmem:[%s334 + $0x118] sm:$0xff] %vm428, %v1682
      %1747 = vst.msk [vmem:[%s334 + $0x120] sm:$0xff] %vm428, %v1683
      %1748 = vst.msk [vmem:[%s334 + $0x128] sm:$0xff] %vm428, %v1684
      %1749 = vst.msk [vmem:[%s334 + $0x130] sm:$0xff] %vm428, %v1685
      %1750 = vst.msk [vmem:[%s334 + $0x138] sm:$0xff] %vm428, %v1686
      %1751 = vst.msk [vmem:[%s334 + $0x140] sm:$0xff] %vm428, %v1687
      %1752 = vst.msk [vmem:[%s334 + $0x148] sm:$0xff] %vm428, %v1688
      %1753 = vst.msk [vmem:[%s334 + $0x150] sm:$0xff] %vm428, %v1689
      %1754 = vst.msk [vmem:[%s334 + $0x158] sm:$0xff] %vm428, %v1690
      %1755 = vst.msk [vmem:[%s334 + $0x160] sm:$0xff] %vm428, %v1691
      %1756 = vst.msk [vmem:[%s334 + $0x168] sm:$0xff] %vm428, %v1692
      %1757 = vst.msk [vmem:[%s334 + $0x170] sm:$0xff] %vm428, %v1693
      %1758 = vst.msk [vmem:[%s334 + $0x178] sm:$0xff] %vm428, %v1694
      %1759 = vst.msk [vmem:[%s334 + $0x180] sm:$0xff] %vm428, %v1695
      %1760 = vst.msk [vmem:[%s334 + $0x188] sm:$0xff] %vm428, %v1696
      %1761 = vst.msk [vmem:[%s334 + $0x190] sm:$0xff] %vm428, %v1697
      %1762 = vst.msk [vmem:[%s334 + $0x198] sm:$0xff] %vm428, %v1698
      %1763 = vst.msk [vmem:[%s334 + $0x1a0] sm:$0xff] %vm428, %v1699
      %1764 = vst.msk [vmem:[%s334 + $0x1a8] sm:$0xff] %vm428, %v1700
      %1765 = vst.msk [vmem:[%s334 + $0x1b0] sm:$0xff] %vm428, %v1701
      %1766 = vst.msk [vmem:[%s334 + $0x1b8] sm:$0xff] %vm428, %v1702
      %1767 = vst.msk [vmem:[%s334 + $0x1c0] sm:$0xff] %vm428, %v1703
      %1768 = vst.msk [vmem:[%s334 + $0x1c8] sm:$0xff] %vm428, %v1704
      %1769 = vst.msk [vmem:[%s334 + $0x1d0] sm:$0xff] %vm428, %v1705
      %1770 = vst.msk [vmem:[%s334 + $0x1d8] sm:$0xff] %vm428, %v1706
      %1771 = vst.msk [vmem:[%s334 + $0x1e0] sm:$0xff] %vm428, %v1707
      %1772 = vst.msk [vmem:[%s334 + $0x1e8] sm:$0xff] %vm428, %v1708
      %1773 = vst.msk [vmem:[%s334 + $0x1f0] sm:$0xff] %vm428, %v1709
      %1774 = vst.msk [vmem:[%s334 + $0x1f8] sm:$0xff] %vm428, %v1710
      %s1775 = smul.u32 64, %s20
      %p1776 = scmp.lt.s32.totalorder %s1775, 127
      %s1777 = scalar_select %p1776, %s1775, 127
      %s1778 = smul.addr %s1777, 8
      %s1779 = scalar_lea.vmem %s9, %s1778
      // Predicated region
      $region57: #{denoise_forward_fused.1} parent=55 // pred_check
        %p1780 = pneg %p232
      $region58: #{denoise_forward_fused.1} parent=55 // pred_check_branch
        %1782 = sbr.rel (%p1780) target = $region60
      $region59: #{denoise_forward_fused.1} parent=55 // pred_region
        %s1783 = smul.u32 64, %s20
      $region60: #{denoise_forward_fused.1} parent=55 // pred_fallthru
        _
    $region56: #{denoise_forward_fused.1} parent=5 // pred_fallthru
      _
    %p1784 = scmp.le.s32.totalorder 2, %s15
    // Predicated region
    $region61: #{denoise_forward_fused.1} parent=5 // pred_check
      %p1785 = pneg %p1784
    $region62: #{denoise_forward_fused.1} parent=5 // pred_check_branch
      %1787 = sbr.rel (%p1785) target = $region64
    $region63: #{denoise_forward_fused.1} parent=5 // pred_region
      %s1788 = ssub.s32 %s15, 2
      // Predicated region
      $region65: #{denoise_forward_fused.1} parent=63 // pred_check
        %p1789 = pneg %p238
      $region66: #{denoise_forward_fused.1} parent=63 // pred_check_branch
        %1791 = sbr.rel (%p1789) target = $region68
      $region67: #{denoise_forward_fused.1} parent=63 // pred_region
        %s1792 = smul.u32 64, %s21
        %p1793 = scmp.lt.s32.totalorder %s1792, 127
        %s1794 = scalar_select %p1793, %s1792, 127
        %s1795 = smul.addr %s1794, 8
        %s1796 = scalar_lea.vmem %s9, %s1795
      $region68: #{denoise_forward_fused.1} parent=63 // pred_fallthru
        _
    $region64: #{denoise_forward_fused.1} parent=5 // pred_fallthru
      _
  $region6: #{denoise_forward_fused.1} parent=0 // loop_footer
    %s19 = sadd.s32 1, %s15
  $region7: #{denoise_forward_fused.1} parent=0 // loop_footer_branch
    %14 = sbr.rel target = $region3
  $region8: #{denoise_forward_fused.1} parent=0 // loop_exit
    _

// kernel: denoise_forward_feature_major.1
$region0: #{denoise_forward_feature_major.1}
  #allocation0 [shape = 'u32[]', space=smem, size = 0x4, offset = 0x4, fixed_abs, tag = 'smem constant byte address 0x4 - core index']
  #allocation1 [shape = 'u32[72,128]{1,0:T(1,128)}', space=vmem, size = 0x9000, scoped, tag = 'internal scratch']
  %s0 = inlined_call_operand.vmem [shape: f32[32,1024], index: 0, kind: input, shape index: {}]
  %s1 = inlined_call_operand.vmem [shape: f32[4,32,32], index: 1, kind: input, shape index: {}]
  %s2 = inlined_call_operand.vmem [shape: f32[4,32,1], index: 2, kind: input, shape index: {}]
  %s3 = inlined_call_operand.vmem [shape: f32[32,1024], index: 3, kind: output, shape index: {}]
  %s4 = sld [smem:[#allocation0]]
  $region87: #{denoise_forward_feature_major.1} parent=0
    _
  %s6 = ssub.s32 1, %s4
  %s7 = scalar_select 0, %s6, %s4
  $region1: #{denoise_forward_feature_major.1} parent=0
    #allocation2 [shape = 'u8[131072]{0}', space=vmem, size = 0x20000, scoped, tag = 'input window, operand 0']
    #allocation3 [shape = 'u8[131072]{0}', space=vmem, size = 0x20000, scoped, tag = 'output window, operand 0']
    loop: start=0, step=1, limit=4
    $region2: #{denoise_forward_feature_major.1} parent=1 // loop_pre_header
      _
    $region3: #{denoise_forward_feature_major.1} parent=1 // loop_header
      %s9 = sphi 0, %s13
      %p10 = scmp.ge.s32.totalorder %s9, 4
      %s19 = sphi 0, %s21
      %s22 = sphi 0, %s19
      %s23 = sphi 0, %s22
      %s39 = sphi 0, %s23
      %s43 = sphi 0, %s43
      %s45 = sphi 0, %s43
      %s46 = sphi 0, %s45
      %s60 = sphi 0, %s46
      %s64 = sphi 0, %s64
      %s66 = sphi 0, %s64
      %s67 = sphi 0, %s66
      %s81 = sphi 0, %s67
      %s87 = sphi 0, %s89
      %s90 = sphi 0, %s87
      %s91 = sphi 0, %s90
      %s107 = sphi 0, %s91
    $region4: #{denoise_forward_feature_major.1} parent=1 // loop_header_branch
      %12 = sbr.rel (%p10) target = $region8
    $region5: #{denoise_forward_feature_major.1} parent=1 // loop_body
      %s14 = ssub.s32 %s9, 1
      %s15 = ssub.s32 %s9, 2
      %s16 = sadd.s32 %s9, 1
      %s17 = ssub.s32 %s9, %s16
      %p18 = scmp.eq.s32.totalorder %s17, 0
      %s20 = sadd.s32 %s19, 1
      %s21 = scalar_select %p18, %s19, %s20
      %p24 = pneg %p18
      %p25 = scmp.eq.s32.totalorder %s9, 1
      %p26 = por %p24, %p25
      %p27 = scmp.ne.s32.totalorder %s19, %s22
      %p28 = scmp.eq.s32.totalorder %s9, 0
      %p29 = por %p27, %p28
      %p30 = scmp.ne.s32.totalorder %s19, %s22
      %p31 = scmp.eq.s32.totalorder %s14, 1
      %p32 = por %p30, %p31
      %p33 = scmp.ne.s32.totalorder %s22, %s23
      %p34 = scmp.eq.s32.totalorder %s14, 0
      %p35 = por %p33, %p34
      %p36 = scmp.ne.s32.totalorder %s22, %s23
      %p37 = scmp.eq.s32.totalorder %s15, 1
      %p38 = por %p36, %p37
      %p40 = scmp.ne.s32.totalorder %s23, %s39
      %p41 = scmp.eq.s32.totalorder %s15, 0
      %p42 = por %p40, %p41
      %s44 = sadd.s32 %s43, 1
      %p47 = scmp.eq.s32.totalorder %s9, 1
      %p48 = scmp.ne.s32.totalorder %s43, %s45
      %p49 = scmp.eq.s32.totalorder %s9, 0
      %p50 = por %p48, %p49
      %p51 = scmp.ne.s32.totalorder %s43, %s45
      %p52 = scmp.eq.s32.totalorder %s14, 1
      %p53 = por %p51, %p52
      %p54 = scmp.ne.s32.totalorder %s45, %s46
      %p55 = scmp.eq.s32.totalorder %s14, 0
      %p56 = por %p54, %p55
      %p57 = scmp.ne.s32.totalorder %s45, %s46
      %p58 = scmp.eq.s32.totalorder %s15, 1
      %p59 = por %p57, %p58
      %p61 = scmp.ne.s32.totalorder %s46, %s60
      %p62 = scmp.eq.s32.totalorder %s15, 0
      %p63 = por %p61, %p62
      %s65 = sadd.s32 %s64, 1
      %p68 = scmp.eq.s32.totalorder %s9, 1
      %p69 = scmp.ne.s32.totalorder %s64, %s66
      %p70 = scmp.eq.s32.totalorder %s9, 0
      %p71 = por %p69, %p70
      %p72 = scmp.ne.s32.totalorder %s64, %s66
      %p73 = scmp.eq.s32.totalorder %s14, 1
      %p74 = por %p72, %p73
      %p75 = scmp.ne.s32.totalorder %s66, %s67
      %p76 = scmp.eq.s32.totalorder %s14, 0
      %p77 = por %p75, %p76
      %p78 = scmp.ne.s32.totalorder %s66, %s67
      %p79 = scmp.eq.s32.totalorder %s15, 1
      %p80 = por %p78, %p79
      %p82 = scmp.ne.s32.totalorder %s67, %s81
      %p83 = scmp.eq.s32.totalorder %s15, 0
      %p84 = por %p82, %p83
      %s85 = ssub.s32 %s9, %s16
      %p86 = scmp.eq.s32.totalorder %s85, 0
      %s88 = sadd.s32 %s87, 1
      %s89 = scalar_select %p86, %s87, %s88
      %p92 = pneg %p86
      %p93 = scmp.eq.s32.totalorder %s9, 1
      %p94 = por %p92, %p93
      %p95 = scmp.ne.s32.totalorder %s87, %s90
      %p96 = scmp.eq.s32.totalorder %s9, 0
      %p97 = por %p95, %p96
      %p98 = scmp.ne.s32.totalorder %s87, %s90
      %p99 = scmp.eq.s32.totalorder %s14, 1
      %p100 = por %p98, %p99
      %p101 = scmp.ne.s32.totalorder %s90, %s91
      %p102 = scmp.eq.s32.totalorder %s14, 0
      %p103 = por %p101, %p102
      %p104 = scmp.ne.s32.totalorder %s90, %s91
      %p105 = scmp.eq.s32.totalorder %s15, 1
      %p106 = por %p104, %p105
      %p108 = scmp.ne.s32.totalorder %s91, %s107
      %p109 = scmp.eq.s32.totalorder %s15, 0
      %p110 = por %p108, %p109
      %p111 = scmp.le.s32.totalorder 1, %s9
      %p112 = scmp.lt.s32.totalorder %s9, 3
      %p113 = pnand %p111, %p112
      %p114 = pneg %p113
      // Predicated region
      $region9: #{denoise_forward_feature_major.1} parent=5 // pred_check
        _
      $region10: #{denoise_forward_feature_major.1} parent=5 // pred_check_branch
        %116 = sbr.rel (%p113) target = $region12
      $region11: #{denoise_forward_feature_major.1} parent=5 // pred_region
        %s117 = ssub.s32 %s9, 1
        // Predicated region
        $region13: #{denoise_forward_feature_major.1} parent=11 // pred_check
          %p118 = pneg %p56
        $region14: #{denoise_forward_feature_major.1} parent=11 // pred_check_branch
          %120 = sbr.rel (%p118) target = $region16
        $region15: #{denoise_forward_feature_major.1} parent=11 // pred_region
          _
        $region16: #{denoise_forward_feature_major.1} parent=11 // pred_fallthru
          _
        // Predicated region
        $region17: #{denoise_forward_feature_major.1} parent=11 // pred_check
          %p121 = pneg %p77
        $region18: #{denoise_forward_feature_major.1} parent=11 // pred_check_branch
          %123 = sbr.rel (%p121) target = $region20
        $region19: #{denoise_forward_feature_major.1} parent=11 // pred_region
          _
        $region20: #{denoise_forward_feature_major.1} parent=11 // pred_fallthru
          _
      $region12: #{denoise_forward_feature_major.1} parent=5 // pred_fallthru
        _
      %p124 = scmp.lt.s32.totalorder %s9, 2
      // Predicated region
      $region21: #{denoise_forward_feature_major.1} parent=5 // pred_check
        %p125 = pneg %p124
      $region22: #{denoise_forward_feature_major.1} parent=5 // pred_check_branch
        %127 = sbr.rel (%p125) target = $region24
      $region23: #{denoise_forward_feature_major.1} parent=5 // pred_region
        // Predicated region
        $region25: #{denoise_forward_feature_major.1} parent=23 // pred_check
          %p128 = pneg %p29
        $region26: #{denoise_forward_feature_major.1} parent=23 // pred_check_branch
          %130 = sbr.rel (%p128) target = $region28
        $region27: #{denoise_forward_feature_major.1} parent=23 // pred_region
          %s131 = sand.u32 %s19, 1
          %s132 = sand.u32 %s19, 1
          %s133 = smul.addr %s132, 128
          %s134 = scalar_lea.vmem [#allocation2], %s133
          %s135 = smul.u32 4, %s9
          %s136 = smul.addr %s135, 8
          %s137 = scalar_lea.vmem %s0, %s136
          // Predicated region
          $region29: #{denoise_forward_feature_major.1} parent=27 // pred_check
            _
          $region30: #{denoise_forward_feature_major.1} parent=27 // pred_check_branch
            %139 = sbr.rel (0) target = $region32
          $region31: #{denoise_forward_feature_major.1} parent=27 // pred_region
            // Predicated region
            $region33: #{denoise_forward_feature_major.1} parent=31 // pred_check
              _
            $region34: #{denoise_forward_feature_major.1} parent=31 // pred_check_branch
              %141 = sbr.rel (0) target = $region36
            $region35: #{denoise_forward_feature_major.1} parent=31 // pred_region
              loop: start=0, step=1, limit=1
              $region37: #{denoise_forward_feature_major.1} parent=35 // loop_pre_header
                _
              $region38: #{denoise_forward_feature_major.1} parent=35 // loop_header
                %s143 = sphi 0, %s147
                %p144 = scmp.ge.s32.totalorder %s143, 1
                %s148 = sphi %s137, %s137
                %s149 = sphi %s134, %s134
              $region39: #{denoise_forward_feature_major.1} parent=35 // loop_header_branch
                %146 = sbr.rel (%p144) target = $region43
              $region40: #{denoise_forward_feature_major.1} parent=35 // loop_body
                %v150 = vld [vmem:[%s148] sm:$0xff]
                %151 = vst [vmem:[%s149] sm:$0xff] %v150
                %v152 = vld [vmem:[%s148 + $0x8] sm:$0xff]
                %153 = vst [vmem:[%s149 + $0x8] sm:$0xff] %v152
                %v154 = vld [vmem:[%s148 + $0x10] sm:$0xff]
                %155 = vst [vmem:[%s149 + $0x10] sm:$0xff] %v154
                %v156 = vld [vmem:[%s148 + $0x18] sm:$0xff]
                %157 = vst [vmem:[%s149 + $0x18] sm:$0xff] %v156
                %v158 = vld [vmem:[%s148 + $0x40] sm:$0xff]
                %159 = vst [vmem:[%s149 + $0x20] sm:$0xff] %v158
                %v160 = vld [vmem:[%s148 + $0x48] sm:$0xff]
                %161 = vst [vmem:[%s149 + $0x28] sm:$0xff] %v160
                %v162 = vld [vmem:[%s148 + $0x50] sm:$0xff]
                %163 = vst [vmem:[%s149 + $0x30] sm:$0xff] %v162
                %v164 = vld [vmem:[%s148 + $0x58] sm:$0xff]
                %165 = vst [vmem:[%s149 + $0x38] sm:$0xff] %v164
                %v166 = vld [vmem:[%s148 + $0x80] sm:$0xff]
                %167 = vst [vmem:[%s149 + $0x40] sm:$0xff] %v166
                %v168 = vld [vmem:[%s148 + $0x88] sm:$0xff]
                %169 = vst [vmem:[%s149 + $0x48] sm:$0xff] %v168
                %v170 = vld [vmem:[%s148 + $0x90] sm:$0xff]
                %171 = vst [vmem:[%s149 + $0x50] sm:$0xff] %v170
                %v172 = vld [vmem:[%s148 + $0x98] sm:$0xff]
                %173 = vst [vmem:[%s149 + $0x58] sm:$0xff] %v172
                %v174 = vld [vmem:[%s148 + $0xc0] sm:$0xff]
                %175 = vst [vmem:[%s149 + $0x60] sm:$0xff] %v174
                %v176 = vld [vmem:[%s148 + $0xc8] sm:$0xff]
                %177 = vst [vmem:[%s149 + $0x68] sm:$0xff] %v176
                %v178 = vld [vmem:[%s148 + $0xd0] sm:$0xff]
                %179 = vst [vmem:[%s149 + $0x70] sm:$0xff] %v178
                %v180 = vld [vmem:[%s148 + $0xd8] sm:$0xff]
                %181 = vst [vmem:[%s149 + $0x78] sm:$0xff] %v180
              $region41: #{denoise_forward_feature_major.1} parent=35 // loop_footer
                %s147 = sadd.s32 1, %s143
              $region42: #{denoise_forward_feature_major.1} parent=35 // loop_footer_branch
                %142 = sbr.rel target = $region38
              $region43: #{denoise_forward_feature_major.1} parent=35 // loop_exit
                _
            $region36: #{denoise_forward_feature_major.1} parent=31 // pred_fallthru
              _
            // Predicated region
            $region44: #{denoise_forward_feature_major.1} parent=31 // pred_check
              _
            $region45: #{denoise_forward_feature_major.1} parent=31 // pred_check_branch
              %183 = sbr.rel target = $region47
            $region46: #{denoise_forward_feature_major.1} parent=31 // pred_region
              _
            $region47: #{denoise_forward_feature_major.1} parent=31 // pred_fallthru
              _
          $region32: #{denoise_forward_feature_major.1} parent=27 // pred_fallthru
            _
          %184 = vnop
        $region28: #{denoise_forward_feature_major.1} parent=23 // pred_fallthru
          _
      $region24: #{denoise_forward_feature_major.1} parent=5 // pred_fallthru
        _
      %p185 = scmp.le.s32.totalorder 1, %s9
      %p186 = scmp.lt.s32.totalorder %s9, 3
      %p187 = pnand %p185, %p186
      %p188 = pneg %p187
      // Predicated region
      $region48: #{denoise_forward_feature_major.1} parent=5 // pred_check
        _
      $region49: #{denoise_forward_feature_major.1} parent=5 // pred_check_branch
        %190 = sbr.rel (%p187) target = $region51
      $region50: #{denoise_forward_feature_major.1} parent=5 // pred_region
        %s191 = ssub.s32 %s9, 1
        %s192 = sand.u32 %s22, 1
        %s193 = sand.u32 %s22, 1
        %s194 = smul.addr %s193, 128
        %s195 = scalar_lea.vmem [#allocation2], %s194
        // Predicated region
        $region52: #{denoise_forward_feature_major.1} parent=50 // pred_check
          %p196 = pneg %p35
        $region53: #{denoise_forward_feature_major.1} parent=50 // pred_check_branch
          %198 = sbr.rel (%p196) target = $region55
        $region54: #{denoise_forward_feature_major.1} parent=50 // pred_region
          _
        $region55: #{denoise_forward_feature_major.1} parent=50 // pred_fallthru
          _
        %s199 = sand.u32 %s22, 1
        %s200 = sand.u32 %s22, 1
        %s201 = smul.addr %s200, 128
        %s202 = scalar_lea.vmem [#allocation2], %s201
        %p203 = pneg %p35
        %p204 = pneg %p32
        %p205 = pneg %p56
        %p206 = pneg %p53
        %p207 = pneg %p77
        %p208 = pneg %p74
        %p209 = pneg %p103
        %p210 = pneg %p100
        %s211 = sand.u32 %s90, 1
        %s212 = sand.u32 %s90, 1
        %s213 = smul.addr %s212, 128
        %s214 = scalar_lea.vmem [#allocation3], %s213
        %s215 = smul.u32 4, %s14
        %s216 = smul.u32 4, %s14
        %v217 = vld [vmem:[%s195] sm:$0xff]
        %v218 = vld [vmem:[%s195 + $0x8] sm:$0xff]
        %v219 = vld [vmem:[%s195 + $0x10] sm:$0xff]
        %v220 = vld [vmem:[%s195 + $0x18] sm:$0xff]
        %v221 = vld [vmem:[%s195 + $0x20] sm:$0xff]
        %v222 = vld [vmem:[%s195 + $0x28] sm:$0xff]
        %v223 = vld [vmem:[%s195 + $0x30] sm:$0xff]
        %v224 = vld [vmem:[%s195 + $0x38] sm:$0xff]
        %v225 = vld [vmem:[%s195 + $0x40] sm:$0xff]
        %v226 = vld [vmem:[%s195 + $0x48] sm:$0xff]
        %v227 = vld [vmem:[%s195 + $0x50] sm:$0xff]
        %v228 = vld [vmem:[%s195 + $0x58] sm:$0xff]
        %v229 = vld [vmem:[%s195 + $0x60] sm:$0xff]
        %v230 = vld [vmem:[%s195 + $0x68] sm:$0xff]
        %v231 = vld [vmem:[%s195 + $0x70] sm:$0xff]
        %v232 = vld [vmem:[%s195 + $0x78] sm:$0xff]
        %v233 = vld [vmem:[%s1] sm:$0xff]
        %v234 = vld [vmem:[%s1 + $0x8] sm:$0xff]
        %v235 = vld [vmem:[%s1 + $0x10] sm:$0xff]
        %v236 = vld [vmem:[%s1 + $0x18] sm:$0xff]
        %v237 = vld [vmem:[%s2] sm:$0xff]
        %v238 = vld [vmem:[%s2 + $0x8] sm:$0xff]
        %v239 = vld [vmem:[%s2 + $0x10] sm:$0xff]
        %v240 = vld [vmem:[%s2 + $0x18] sm:$0xff]
        %242 = vset.pattern.permute.xlu0 0
        %243 = vperm.xlu0 %242, %v237
        %v244 = vpop.permute.xlu0 %243
        %247 = vset.pattern.permute.xlu0 0
        %248 = vperm.xlu0 %247, %v238
        %v249 = vpop.permute.xlu0 %248
        %252 = vset.pattern.permute.xlu0 0
        %253 = vperm.xlu0 %252, %v239
        %v254 = vpop.permute.xlu0 %253
        %257 = vset.pattern.permute.xlu0 0
        %258 = vperm.xlu0 %257, %v240
        %v259 = vpop.permute.xlu0 %258
        %vm261 = vcmask 261120
        %v263 = vsel %vm261, %v233, 0
        %v266 = vsel %vm261, %v234, 0
        %v269 = vsel %vm261, %v235, 0
        %v272 = vsel %vm261, %v236, 0
        %274 = vmatpush.msra.mxu0 0.0
        %275 = vmatpush.msra.mxu0 0.0
        %276 = vmatpush.msra.mxu0 0.0
        %277 = vmatpush.msra.mxu0 0.0
        %278 = vmatpush.msra.mxu0 0.0
        %279 = vmatpush.msra.mxu0 0.0
        %280 = vmatpush.msra.mxu0 0.0
        %281 = vmatpush.msra.mxu0 0.0
        %282 = vmatpush.msra.mxu0 0.0
        %283 = vmatpush.msra.mxu0 0.0
        %284 = vmatpush.msra.mxu0 0.0
        %285 = vmatpush.msra.mxu0 0.0
        %286 = vmatpush.msra.mxu0 %v229
        %287 = vmatpush.msra.mxu0 %v225
        %288 = vmatpush.msra.mxu0 %v221
        %289 = vmatpush.msra.mxu0 %v217
        %290 = vmatmul.f32.gmra.mxu0 %v263
        %v291 = vpop.f32.mrf.mxu0
        %v292 = vadd.f32 %v244, %v291
        %293 = vmatmul.f32.gmra.mxu0 %v266
        %v294 = vpop.f32.mrf.mxu0
        %v295 = vadd.f32 %v249, %v294
        %296 = vmatmul.f32.gmra.mxu0 %v269
        %v297 = vpop.f32.mrf.mxu0
        %v298 = vadd.f32 %v254, %v297
        %299 = vmatmul.f32.gmra.mxu0 %v272
        %v300 = vpop.f32.mrf.mxu0
        %v301 = vadd.f32 %v259, %v300
        %302 = vdwg.mxu0
        %303 = vmatpush.msra.mxu0 0.0
        %304 = vmatpush.msra.mxu0 0.0
        %305 = vmatpush.msra.mxu0 0.0
        %306 = vmatpush.msra.mxu0 0.0
        %307 = vmatpush.msra.mxu0 0.0
        %308 = vmatpush.msra.mxu0 0.0
        %309 = vmatpush.msra.mxu0 0.0
        %310 = vmatpush.msra.mxu0 0.0
        %311 = vmatpush.msra.mxu0 0.0
        %312 = vmatpush.msra.mxu0 0.0
        %313 = vmatpush.msra.mxu0 0.0
        %314 = vmatpush.msra.mxu0 0.0
        %315 = vmatpush.msra.mxu0 %v230
        %316 = vmatpush.msra.mxu0 %v226
        %317 = vmatpush.msra.mxu0 %v222
        %318 = vmatpush.msra.mxu0 %v218
        %319 = vmatmul.f32.gmra.mxu0 %v263
        %v320 = vpop.f32.mrf.mxu0
        %v321 = vadd.f32 %v244, %v320
        %322 = vmatmul.f32.gmra.mxu0 %v266
        %v323 = vpop.f32.mrf.mxu0
        %v324 = vadd.f32 %v249, %v323
        %325 = vmatmul.f32.gmra.mxu0 %v269
        %v326 = vpop.f32.mrf.mxu0
        %v327 = vadd.f32 %v254, %v326
        %328 = vmatmul.f32.gmra.mxu0 %v272
        %v329 = vpop.f32.mrf.mxu0
        %v330 = vadd.f32 %v259, %v329
        %331 = vdwg.mxu0
        %332 = vmatpush.msra.mxu0 0.0
        %333 = vmatpush.msra.mxu0 0.0
        %334 = vmatpush.msra.mxu0 0.0
        %335 = vmatpush.msra.mxu0 0.0
        %336 = vmatpush.msra.mxu0 0.0
        %337 = vmatpush.msra.mxu0 0.0
        %338 = vmatpush.msra.mxu0 0.0
        %339 = vmatpush.msra.mxu0 0.0
        %340 = vmatpush.msra.mxu0 0.0
        %341 = vmatpush.msra.mxu0 0.0
        %342 = vmatpush.msra.mxu0 0.0
        %343 = vmatpush.msra.mxu0 0.0
        %344 = vmatpush.msra.mxu0 %v231
        %345 = vmatpush.msra.mxu0 %v227
        %346 = vmatpush.msra.mxu0 %v223
        %347 = vmatpush.msra.mxu0 %v219
        %348 = vmatmul.f32.gmra.mxu0 %v263
        %v349 = vpop.f32.mrf.mxu0
        %v350 = vadd.f32 %v244, %v349
        %351 = vmatmul.f32.gmra.mxu0 %v266
        %v352 = vpop.f32.mrf.mxu0
        %v353 = vadd.f32 %v249, %v352
        %354 = vmatmul.f32.gmra.mxu0 %v269
        %v355 = vpop.f32.mrf.mxu0
        %v356 = vadd.f32 %v254, %v355
        %357 = vmatmul.f32.gmra.mxu0 %v272
        %v358 = vpop.f32.mrf.mxu0
        %v359 = vadd.f32 %v259, %v358
        %360 = vdwg.mxu0
        %361 = vmatpush.msra.mxu0 0.0
        %362 = vmatpush.msra.mxu0 0.0
        %363 = vmatpush.msra.mxu0 0.0
        %364 = vmatpush.msra.mxu0 0.0
        %365 = vmatpush.msra.mxu0 0.0
        %366 = vmatpush.msra.mxu0 0.0
        %367 = vmatpush.msra.mxu0 0.0
        %368 = vmatpush.msra.mxu0 0.0
        %369 = vmatpush.msra.mxu0 0.0
        %370 = vmatpush.msra.mxu0 0.0
        %371 = vmatpush.msra.mxu0 0.0
        %372 = vmatpush.msra.mxu0 0.0
        %373 = vmatpush.msra.mxu0 %v232
        %374 = vmatpush.msra.mxu0 %v228
        %375 = vmatpush.msra.mxu0 %v224
        %376 = vmatpush.msra.mxu0 %v220
        %377 = vmatmul.f32.gmra.mxu0 %v263
        %v378 = vpop.f32.mrf.mxu0
        %v379 = vadd.f32 %v244, %v378
        %380 = vmatmul.f32.gmra.mxu0 %v266
        %v381 = vpop.f32.mrf.mxu0
        %v382 = vadd.f32 %v249, %v381
        %383 = vmatmul.f32.gmra.mxu0 %v269
        %v384 = vpop.f32.mrf.mxu0
        %v385 = vadd.f32 %v254, %v384
        %386 = vmatmul.f32.gmra.mxu0 %v272
        %v387 = vpop.f32.mrf.mxu0
        %v388 = vadd.f32 %v259, %v387
        %389 = vdwg.mxu0
        %v390 = vmax.f32 %v292, 0.0
        %v391 = vmax.f32 %v321, 0.0
        %v392 = vmax.f32 %v350, 0.0
        %v393 = vmax.f32 %v379, 0.0
        %v394 = vmax.f32 %v295, 0.0
        %v395 = vmax.f32 %v324, 0.0
        %v396 = vmax.f32 %v353, 0.0
        %v397 = vmax.f32 %v382, 0.0
        %v398 = vmax.f32 %v298, 0.0
        %v399 = vmax.f32 %v327, 0.0
        %v400 = vmax.f32 %v356, 0.0
        %v401 = vmax.f32 %v385, 0.0
        %v402 = vmax.f32 %v301, 0.0
        %v403 = vmax.f32 %v330, 0.0
        %v404 = vmax.f32 %v359, 0.0
        %v405 = vmax.f32 %v388, 0.0
        %s406 = scalar_lea.vmem %s1, 32
        %v407 = vld [vmem:[%s406] sm:$0xff]
        %v408 = vld [vmem:[%s406 + $0x8] sm:$0xff]
        %v409 = vld [vmem:[%s406 + $0x10] sm:$0xff]
        %v410 = vld [vmem:[%s406 + $0x18] sm:$0xff]
        %s411 = scalar_lea.vmem %s2, 32
        %v412 = vld [vmem:[%s411] sm:$0xff]
        %v413 = vld [vmem:[%s411 + $0x8] sm:$0xff]
        %v414 = vld [vmem:[%s411 + $0x10] sm:$0xff]
        %v415 = vld [vmem:[%s411 + $0x18] sm:$0xff]
        %417 = vset.pattern.permute.xlu0 0
        %418 = vperm.xlu0 %417, %v412
        %v419 = vpop.permute.xlu0 %418
        %422 = vset.pattern.permute.xlu0 0
        %423 = vperm.xlu0 %422, %v413
        %v424 = vpop.permute.xlu0 %423
        %427 = vset.pattern.permute.xlu0 0
        %428 = vperm.xlu0 %427, %v414
        %v429 = vpop.permute.xlu0 %428
        %432 = vset.pattern.permute.xlu0 0
        %433 = vperm.xlu0 %432, %v415
        %v434 = vpop.permute.xlu0 %433
        %v437 = vsel %vm261, %v407, 0
        %v440 = vsel %vm261, %v408, 0
        %v443 = vsel %vm261, %v409, 0
        %v446 = vsel %vm261, %v410, 0
        %448 = vmatpush.msra.mxu0 0.0
        %449 = vmatpush.msra.mxu0 0.0
        %450 = vmatpush.msra.mxu0 0.0
        %451 = vmatpush.msra.mxu0 0.0
        %452 = vmatpush.msra.mxu0 0.0
        %453 = vmatpush.msra.mxu0 0.0
        %454 = vmatpush.msra.mxu0 0.0
        %455 = vmatpush.msra.mxu0 0.0
        %456 = vmatpush.msra.mxu0 0.0
        %457 = vmatpush.msra.mxu0 0.0
        %458 = vmatpush.msra.mxu0 0.0
        %459 = vmatpush.msra.mxu0 0.0
        %460 = vmatpush.msra.mxu0 %v402
        %461 = vmatpush.msra.mxu0 %v398
        %462 = vmatpush.msra.mxu0 %v394
        %463 = vmatpush.msra.mxu0 %v390
        %464 = vmatmul.f32.gmra.mxu0 %v437
        %v465 = vpop.f32.mrf.mxu0
        %v466 = vadd.f32 %v419, %v465
        %467 = vmatmul.f32.gmra.mxu0 %v440
        %v468 = vpop.f32.mrf.mxu0
        %v469 = vadd.f32 %v424, %v468
        %470 = vmatmul.f32.gmra.mxu0 %v443
        %v471 = vpop.f32.mrf.mxu0
        %v472 = vadd.f32 %v429, %v471
        %473 = vmatmul.f32.gmra.mxu0 %v446
        %v474 = vpop.f32.mrf.mxu0
        %v475 = vadd.f32 %v434, %v474
        %476 = vdwg.mxu0
        %477 = vmatpush.msra.mxu0 0.0
        %478 = vmatpush.msra.mxu0 0.0
        %479 = vmatpush.msra.mxu0 0.0
        %480 = vmatpush.msra.mxu0 0.0
        %481 = vmatpush.msra.mxu0 0.0
        %482 = vmatpush.msra.mxu0 0.0
        %483 = vmatpush.msra.mxu0 0.0
        %484 = vmatpush.msra.mxu0 0.0
        %485 = vmatpush.msra.mxu0 0.0
        %486 = vmatpush.msra.mxu0 0.0
        %487 = vmatpush.msra.mxu0 0.0
        %488 = vmatpush.msra.mxu0 0.0
        %489 = vmatpush.msra.mxu0 %v403
        %490 = vmatpush.msra.mxu0 %v399
        %491 = vmatpush.msra.mxu0 %v395
        %492 = vmatpush.msra.mxu0 %v391
        %493 = vmatmul.f32.gmra.mxu0 %v437
        %v494 = vpop.f32.mrf.mxu0
        %v495 = vadd.f32 %v419, %v494
        %496 = vmatmul.f32.gmra.mxu0 %v440
        %v497 = vpop.f32.mrf.mxu0
        %v498 = vadd.f32 %v424, %v497
        %499 = vmatmul.f32.gmra.mxu0 %v443
        %v500 = vpop.f32.mrf.mxu0
        %v501 = vadd.f32 %v429, %v500
        %502 = vmatmul.f32.gmra.mxu0 %v446
        %v503 = vpop.f32.mrf.mxu0
        %v504 = vadd.f32 %v434, %v503
        %505 = vdwg.mxu0
        %506 = vmatpush.msra.mxu0 0.0
        %507 = vmatpush.msra.mxu0 0.0
        %508 = vmatpush.msra.mxu0 0.0
        %509 = vmatpush.msra.mxu0 0.0
        %510 = vmatpush.msra.mxu0 0.0
        %511 = vmatpush.msra.mxu0 0.0
        %512 = vmatpush.msra.mxu0 0.0
        %513 = vmatpush.msra.mxu0 0.0
        %514 = vmatpush.msra.mxu0 0.0
        %515 = vmatpush.msra.mxu0 0.0
        %516 = vmatpush.msra.mxu0 0.0
        %517 = vmatpush.msra.mxu0 0.0
        %518 = vmatpush.msra.mxu0 %v404
        %519 = vmatpush.msra.mxu0 %v400
        %520 = vmatpush.msra.mxu0 %v396
        %521 = vmatpush.msra.mxu0 %v392
        %522 = vmatmul.f32.gmra.mxu0 %v437
        %v523 = vpop.f32.mrf.mxu0
        %v524 = vadd.f32 %v419, %v523
        %525 = vmatmul.f32.gmra.mxu0 %v440
        %v526 = vpop.f32.mrf.mxu0
        %v527 = vadd.f32 %v424, %v526
        %528 = vmatmul.f32.gmra.mxu0 %v443
        %v529 = vpop.f32.mrf.mxu0
        %v530 = vadd.f32 %v429, %v529
        %531 = vmatmul.f32.gmra.mxu0 %v446
        %v532 = vpop.f32.mrf.mxu0
        %v533 = vadd.f32 %v434, %v532
        %534 = vdwg.mxu0
        %535 = vmatpush.msra.mxu0 0.0
        %536 = vmatpush.msra.mxu0 0.0
        %537 = vmatpush.msra.mxu0 0.0
        %538 = vmatpush.msra.mxu0 0.0
        %539 = vmatpush.msra.mxu0 0.0
        %540 = vmatpush.msra.mxu0 0.0
        %541 = vmatpush.msra.mxu0 0.0
        %542 = vmatpush.msra.mxu0 0.0
        %543 = vmatpush.msra.mxu0 0.0
        %544 = vmatpush.msra.mxu0 0.0
        %545 = vmatpush.msra.mxu0 0.0
        %546 = vmatpush.msra.mxu0 0.0
        %547 = vmatpush.msra.mxu0 %v405
        %548 = vmatpush.msra.mxu0 %v401
        %549 = vmatpush.msra.mxu0 %v397
        %550 = vmatpush.msra.mxu0 %v393
        %551 = vmatmul.f32.gmra.mxu0 %v437
        %v552 = vpop.f32.mrf.mxu0
        %v553 = vadd.f32 %v419, %v552
        %554 = vmatmul.f32.gmra.mxu0 %v440
        %v555 = vpop.f32.mrf.mxu0
        %v556 = vadd.f32 %v424, %v555
        %557 = vmatmul.f32.gmra.mxu0 %v443
        %v558 = vpop.f32.mrf.mxu0
        %v559 = vadd.f32 %v429, %v558
        %560 = vmatmul.f32.gmra.mxu0 %v446
        %v561 = vpop.f32.mrf.mxu0
        %v562 = vadd.f32 %v434, %v561
        %563 = vdwg.mxu0
        %v564 = vmax.f32 %v466, 0.0
        %v565 = vmax.f32 %v495, 0.0
        %v566 = vmax.f32 %v524, 0.0
        %v567 = vmax.f32 %v553, 0.0
        %v568 = vmax.f32 %v469, 0.0
        %v569 = vmax.f32 %v498, 0.0
        %v570 = vmax.f32 %v527, 0.0
        %v571 = vmax.f32 %v556, 0.0
        %v572 = vmax.f32 %v472, 0.0
        %v573 = vmax.f32 %v501, 0.0
        %v574 = vmax.f32 %v530, 0.0
        %v575 = vmax.f32 %v559, 0.0
        %v576 = vmax.f32 %v475, 0.0
        %v577 = vmax.f32 %v504, 0.0
        %v578 = vmax.f32 %v533, 0.0
        %v579 = vmax.f32 %v562, 0.0
        %s580 = scalar_lea.vmem %s1, 64
        %v581 = vld [vmem:[%s580] sm:$0xff]
        %v582 = vld [vmem:[%s580 + $0x8] sm:$0xff]
        %v583 = vld [vmem:[%s580 + $0x10] sm:$0xff]
        %v584 = vld [vmem:[%s580 + $0x18] sm:$0xff]
        %s585 = scalar_lea.vmem %s2, 64
        %v586 = vld [vmem:[%s585] sm:$0xff]
        %v587 = vld [vmem:[%s585 + $0x8] sm:$0xff]
        %v588 = vld [vmem:[%s585 + $0x10] sm:$0xff]
        %v589 = vld [vmem:[%s585 + $0x18] sm:$0xff]
        %591 = vset.pattern.permute.xlu0 0
        %592 = vperm.xlu0 %591, %v586
        %v593 = vpop.permute.xlu0 %592
        %596 = vset.pattern.permute.xlu0 0
        %597 = vperm.xlu0 %596, %v587
        %v598 = vpop.permute.xlu0 %597
        %601 = vset.pattern.permute.xlu0 0
        %602 = vperm.xlu0 %601, %v588
        %v603 = vpop.permute.xlu0 %602
        %606 = vset.pattern.permute.xlu0 0
        %607 = vperm.xlu0 %606, %v589
        %v608 = vpop.permute.xlu0 %607
        %v611 = vsel %vm261, %v581, 0
        %v614 = vsel %vm261, %v582, 0
        %v617 = vsel %vm261, %v583, 0
        %v620 = vsel %vm261, %v584, 0
        %622 = vmatpush.msra.mxu0 0.0
        %623 = vmatpush.msra.mxu0 0.0
        %624 = vmatpush.msra.mxu0 0.0
        %625 = vmatpush.msra.mxu0 0.0
        %626 = vmatpush.msra.mxu0 0.0
        %627 = vmatpush.msra.mxu0 0.0
        %628 = vmatpush.msra.mxu0 0.0
        %629 = vmatpush.msra.mxu0 0.0
        %630 = vmatpush.msra.mxu0 0.0
        %631 = vmatpush.msra.mxu0 0.0
        %632 = vmatpush.msra.mxu0 0.0
        %633 = vmatpush.msra.mxu0 0.0
        %634 = vmatpush.msra.mxu0 %v576
        %635 = vmatpush.msra.mxu0 %v572
        %636 = vmatpush.msra.mxu0 %v568
        %637 = vmatpush.msra.mxu0 %v564
        %638 = vmatmul.f32.gmra.mxu0 %v611
        %v639 = vpop.f32.mrf.mxu0
        %v640 = vadd.f32 %v593, %v639
        %641 = vmatmul.f32.gmra.mxu0 %v614
        %v642 = vpop.f32.mrf.mxu0
        %v643 = vadd.f32 %v598, %v642
        %644 = vmatmul.f32.gmra.mxu0 %v617
        %v645 = vpop.f32.mrf.mxu0
        %v646 = vadd.f32 %v603, %v645
        %647 = vmatmul.f32.gmra.mxu0 %v620
        %v648 = vpop.f32.mrf.mxu0
        %v649 = vadd.f32 %v608, %v648
        %650 = vdwg.mxu0
        %651 = vmatpush.msra.mxu0 0.0
        %652 = vmatpush.msra.mxu0 0.0
        %653 = vmatpush.msra.mxu0 0.0
        %654 = vmatpush.msra.mxu0 0.0
        %655 = vmatpush.msra.mxu0 0.0
        %656 = vmatpush.msra.mxu0 0.0
        %657 = vmatpush.msra.mxu0 0.0
        %658 = vmatpush.msra.mxu0 0.0
        %659 = vmatpush.msra.mxu0 0.0
        %660 = vmatpush.msra.mxu0 0.0
        %661 = vmatpush.msra.mxu0 0.0
        %662 = vmatpush.msra.mxu0 0.0
        %663 = vmatpush.msra.mxu0 %v577
        %664 = vmatpush.msra.mxu0 %v573
        %665 = vmatpush.msra.mxu0 %v569
        %666 = vmatpush.msra.mxu0 %v565
        %667 = vmatmul.f32.gmra.mxu0 %v611
        %v668 = vpop.f32.mrf.mxu0
        %v669 = vadd.f32 %v593, %v668
        %670 = vmatmul.f32.gmra.mxu0 %v614
        %v671 = vpop.f32.mrf.mxu0
        %v672 = vadd.f32 %v598, %v671
        %673 = vmatmul.f32.gmra.mxu0 %v617
        %v674 = vpop.f32.mrf.mxu0
        %v675 = vadd.f32 %v603, %v674
        %676 = vmatmul.f32.gmra.mxu0 %v620
        %v677 = vpop.f32.mrf.mxu0
        %v678 = vadd.f32 %v608, %v677
        %679 = vdwg.mxu0
        %680 = vmatpush.msra.mxu0 0.0
        %681 = vmatpush.msra.mxu0 0.0
        %682 = vmatpush.msra.mxu0 0.0
        %683 = vmatpush.msra.mxu0 0.0
        %684 = vmatpush.msra.mxu0 0.0
        %685 = vmatpush.msra.mxu0 0.0
        %686 = vmatpush.msra.mxu0 0.0
        %687 = vmatpush.msra.mxu0 0.0
        %688 = vmatpush.msra.mxu0 0.0
        %689 = vmatpush.msra.mxu0 0.0
        %690 = vmatpush.msra.mxu0 0.0
        %691 = vmatpush.msra.mxu0 0.0
        %692 = vmatpush.msra.mxu0 %v578
        %693 = vmatpush.msra.mxu0 %v574
        %694 = vmatpush.msra.mxu0 %v570
        %695 = vmatpush.msra.mxu0 %v566
        %696 = vmatmul.f32.gmra.mxu0 %v611
        %v697 = vpop.f32.mrf.mxu0
        %v698 = vadd.f32 %v593, %v697
        %699 = vmatmul.f32.gmra.mxu0 %v614
        %v700 = vpop.f32.mrf.mxu0
        %v701 = vadd.f32 %v598, %v700
        %702 = vmatmul.f32.gmra.mxu0 %v617
        %v703 = vpop.f32.mrf.mxu0
        %v704 = vadd.f32 %v603, %v703
        %705 = vmatmul.f32.gmra.mxu0 %v620
        %v706 = vpop.f32.mrf.mxu0
        %v707 = vadd.f32 %v608, %v706
        %708 = vdwg.mxu0
        %709 = vmatpush.msra.mxu0 0.0
        %710 = vmatpush.msra.mxu0 0.0
        %711 = vmatpush.msra.mxu0 0.0
        %712 = vmatpush.msra.mxu0 0.0
        %713 = vmatpush.msra.mxu0 0.0
        %714 = vmatpush.msra.mxu0 0.0
        %715 = vmatpush.msra.mxu0 0.0
        %716 = vmatpush.msra.mxu0 0.0
        %717 = vmatpush.msra.mxu0 0.0
        %718 = vmatpush.msra.mxu0 0.0
        %719 = vmatpush.msra.mxu0 0.0
        %720 = vmatpush.msra.mxu0 0.0
        %721 = vmatpush.msra.mxu0 %v579
        %722 = vmatpush.msra.mxu0 %v575
        %723 = vmatpush.msra.mxu0 %v571
        %724 = vmatpush.msra.mxu0 %v567
        %725 = vmatmul.f32.gmra.mxu0 %v611
        %v726 = vpop.f32.mrf.mxu0
        %v727 = vadd.f32 %v593, %v726
        %728 = vmatmul.f32.gmra.mxu0 %v614
        %v729 = vpop.f32.mrf.mxu0
        %v730 = vadd.f32 %v598, %v729
        %731 = vmatmul.f32.gmra.mxu0 %v617
        %v732 = vpop.f32.mrf.mxu0
        %v733 = vadd.f32 %v603, %v732
        %734 = vmatmul.f32.gmra.mxu0 %v620
        %v735 = vpop.f32.mrf.mxu0
        %v736 = vadd.f32 %v608, %v735
        %737 = vdwg.mxu0
        %v738 = vmax.f32 %v640, 0.0
        %v739 = vmax.f32 %v669, 0.0
        %v740 = vmax.f32 %v698, 0.0
        %v741 = vmax.f32 %v727, 0.0
        %v742 = vmax.f32 %v643, 0.0
        %v743 = vmax.f32 %v672, 0.0
        %v744 = vmax.f32 %v701, 0.0
        %v745 = vmax.f32 %v730, 0.0
        %v746 = vmax.f32 %v646, 0.0
        %v747 = vmax.f32 %v675, 0.0
        %v748 = vmax.f32 %v704, 0.0
        %v749 = vmax.f32 %v733, 0.0
        %v750 = vmax.f32 %v649, 0.0
        %v751 = vmax.f32 %v678, 0.0
        %v752 = vmax.f32 %v707, 0.0
        %v753 = vmax.f32 %v736, 0.0
        %s754 = scalar_lea.vmem %s1, 96
        %v755 = vld [vmem:[%s754] sm:$0xff]
        %v756 = vld [vmem:[%s754 + $0x8] sm:$0xff]
        %v757 = vld [vmem:[%s754 + $0x10] sm:$0xff]
        %v758 = vld [vmem:[%s754 + $0x18] sm:$0xff]
        %s759 = scalar_lea.vmem %s2, 96
        %v760 = vld [vmem:[%s759] sm:$0xff]
        %v761 = vld [vmem:[%s759 + $0x8] sm:$0xff]
        %v762 = vld [vmem:[%s759 + $0x10] sm:$0xff]
        %v763 = vld [vmem:[%s759 + $0x18] sm:$0xff]
        %765 = vset.pattern.permute.xlu0 0
        %766 = vperm.xlu0 %765, %v760
        %v767 = vpop.permute.xlu0 %766
        %770 = vset.pattern.permute.xlu0 0
        %771 = vperm.xlu0 %770, %v761
        %v772 = vpop.permute.xlu0 %771
        %775 = vset.pattern.permute.xlu0 0
        %776 = vperm.xlu0 %775, %v762
        %v777 = vpop.permute.xlu0 %776
        %780 = vset.pattern.permute.xlu0 0
        %781 = vperm.xlu0 %780, %v763
        %v782 = vpop.permute.xlu0 %781
        %v785 = vsel %vm261, %v755, 0
        %v788 = vsel %vm261, %v756, 0
        %v791 = vsel %vm261, %v757, 0
        %v794 = vsel %vm261, %v758, 0
        %796 = vmatpush.msra.mxu0 0.0
        %797 = vmatpush.msra.mxu0 0.0
        %798 = vmatpush.msra.mxu0 0.0
        %799 = vmatpush.msra.mxu0 0.0
        %800 = vmatpush.msra.mxu0 0.0
        %801 = vmatpush.msra.mxu0 0.0
        %802 = vmatpush.msra.mxu0 0.0
        %803 = vmatpush.msra.mxu0 0.0
        %804 = vmatpush.msra.mxu0 0.0
        %805 = vmatpush.msra.mxu0 0.0
        %806 = vmatpush.msra.mxu0 0.0
        %807 = vmatpush.msra.mxu0 0.0
        %808 = vmatpush.msra.mxu0 %v750
        %809 = vmatpush.msra.mxu0 %v746
        %810 = vmatpush.msra.mxu0 %v742
        %811 = vmatpush.msra.mxu0 %v738
        %812 = vmatmul.f32.gmra.mxu0 %v785
        %v813 = vpop.f32.mrf.mxu0
        %v814 = vadd.f32 %v767, %v813
        %815 = vmatmul.f32.gmra.mxu0 %v788
        %v816 = vpop.f32.mrf.mxu0
        %v817 = vadd.f32 %v772, %v816
        %818 = vmatmul.f32.gmra.mxu0 %v791
        %v819 = vpop.f32.mrf.mxu0
        %v820 = vadd.f32 %v777, %v819
        %821 = vmatmul.f32.gmra.mxu0 %v794
        %v822 = vpop.f32.mrf.mxu0
        %v823 = vadd.f32 %v782, %v822
        %824 = vdwg.mxu0
        %825 = vmatpush.msra.mxu0 0.0
        %826 = vmatpush.msra.mxu0 0.0
        %827 = vmatpush.msra.mxu0 0.0
        %828 = vmatpush.msra.mxu0 0.0
        %829 = vmatpush.msra.mxu0 0.0
        %830 = vmatpush.msra.mxu0 0.0
        %831 = vmatpush.msra.mxu0 0.0
        %832 = vmatpush.msra.mxu0 0.0
        %833 = vmatpush.msra.mxu0 0.0
        %834 = vmatpush.msra.mxu0 0.0
        %835 = vmatpush.msra.mxu0 0.0
        %836 = vmatpush.msra.mxu0 0.0
        %837 = vmatpush.msra.mxu0 %v751
        %838 = vmatpush.msra.mxu0 %v747
        %839 = vmatpush.msra.mxu0 %v743
        %840 = vmatpush.msra.mxu0 %v739
        %841 = vmatmul.f32.gmra.mxu0 %v785
        %v842 = vpop.f32.mrf.mxu0
        %v843 = vadd.f32 %v767, %v842
        %844 = vmatmul.f32.gmra.mxu0 %v788
        %v845 = vpop.f32.mrf.mxu0
        %v846 = vadd.f32 %v772, %v845
        %847 = vmatmul.f32.gmra.mxu0 %v791
        %v848 = vpop.f32.mrf.mxu0
        %v849 = vadd.f32 %v777, %v848
        %850 = vmatmul.f32.gmra.mxu0 %v794
        %v851 = vpop.f32.mrf.mxu0
        %v852 = vadd.f32 %v782, %v851
        %853 = vdwg.mxu0
        %854 = vmatpush.msra.mxu0 0.0
        %855 = vmatpush.msra.mxu0 0.0
        %856 = vmatpush.msra.mxu0 0.0
        %857 = vmatpush.msra.mxu0 0.0
        %858 = vmatpush.msra.mxu0 0.0
        %859 = vmatpush.msra.mxu0 0.0
        %860 = vmatpush.msra.mxu0 0.0
        %861 = vmatpush.msra.mxu0 0.0
        %862 = vmatpush.msra.mxu0 0.0
        %863 = vmatpush.msra.mxu0 0.0
        %864 = vmatpush.msra.mxu0 0.0
        %865 = vmatpush.msra.mxu0 0.0
        %866 = vmatpush.msra.mxu0 %v752
        %867 = vmatpush.msra.mxu0 %v748
        %868 = vmatpush.msra.mxu0 %v744
        %869 = vmatpush.msra.mxu0 %v740
        %870 = vmatmul.f32.gmra.mxu0 %v785
        %v871 = vpop.f32.mrf.mxu0
        %v872 = vadd.f32 %v767, %v871
        %873 = vmatmul.f32.gmra.mxu0 %v788
        %v874 = vpop.f32.mrf.mxu0
        %v875 = vadd.f32 %v772, %v874
        %876 = vmatmul.f32.gmra.mxu0 %v791
        %v877 = vpop.f32.mrf.mxu0
        %v878 = vadd.f32 %v777, %v877
        %879 = vmatmul.f32.gmra.mxu0 %v794
        %v880 = vpop.f32.mrf.mxu0
        %v881 = vadd.f32 %v782, %v880
        %882 = vdwg.mxu0
        %883 = vmatpush.msra.mxu0 0.0
        %884 = vmatpush.msra.mxu0 0.0
        %885 = vmatpush.msra.mxu0 0.0
        %886 = vmatpush.msra.mxu0 0.0
        %887 = vmatpush.msra.mxu0 0.0
        %888 = vmatpush.msra.mxu0 0.0
        %889 = vmatpush.msra.mxu0 0.0
        %890 = vmatpush.msra.mxu0 0.0
        %891 = vmatpush.msra.mxu0 0.0
        %892 = vmatpush.msra.mxu0 0.0
        %893 = vmatpush.msra.mxu0 0.0
        %894 = vmatpush.msra.mxu0 0.0
        %895 = vmatpush.msra.mxu0 %v753
        %896 = vmatpush.msra.mxu0 %v749
        %897 = vmatpush.msra.mxu0 %v745
        %898 = vmatpush.msra.mxu0 %v741
        %899 = vmatmul.f32.gmra.mxu0 %v785
        %v900 = vpop.f32.mrf.mxu0
        %v901 = vadd.f32 %v767, %v900
        %902 = vmatmul.f32.gmra.mxu0 %v788
        %v903 = vpop.f32.mrf.mxu0
        %v904 = vadd.f32 %v772, %v903
        %905 = vmatmul.f32.gmra.mxu0 %v791
        %v906 = vpop.f32.mrf.mxu0
        %v907 = vadd.f32 %v777, %v906
        %908 = vmatmul.f32.gmra.mxu0 %v794
        %v909 = vpop.f32.mrf.mxu0
        %v910 = vadd.f32 %v782, %v909
        %911 = vdwg.mxu0
        %v912 = vmax.f32 %v814, 0.0
        %v913 = vmax.f32 %v843, 0.0
        %v914 = vmax.f32 %v872, 0.0
        %v915 = vmax.f32 %v901, 0.0
        %v916 = vmax.f32 %v817, 0.0
        %v917 = vmax.f32 %v846, 0.0
        %v918 = vmax.f32 %v875, 0.0
        %v919 = vmax.f32 %v904, 0.0
        %v920 = vmax.f32 %v820, 0.0
        %v921 = vmax.f32 %v849, 0.0
        %v922 = vmax.f32 %v878, 0.0
        %v923 = vmax.f32 %v907, 0.0
        %v924 = vmax.f32 %v823, 0.0
        %v925 = vmax.f32 %v852, 0.0
        %v926 = vmax.f32 %v881, 0.0
        %v927 = vmax.f32 %v910, 0.0
        %928 = vst [vmem:[%s214] sm:$0xff] %v912
        %929 = vst [vmem:[%s214 + $0x8] sm:$0xff] %v913
        %930 = vst [vmem:[%s214 + $0x10] sm:$0xff] %v914
        %931 = vst [vmem:[%s214 + $0x18] sm:$0xff] %v915
        %932 = vst [vmem:[%s214 + $0x20] sm:$0xff] %v916
        %933 = vst [vmem:[%s214 + $0x28] sm:$0xff] %v917
        %934 = vst [vmem:[%s214 + $0x30] sm:$0xff] %v918
        %935 = vst [vmem:[%s214 + $0x38] sm:$0xff] %v919
        %936 = vst [vmem:[%s214 + $0x40] sm:$0xff] %v920
        %937 = vst [vmem:[%s214 + $0x48] sm:$0xff] %v921
        %938 = vst [vmem:[%s214 + $0x50] sm:$0xff] %v922
        %939 = vst [vmem:[%s214 + $0x58] sm:$0xff] %v923
        %940 = vst [vmem:[%s214 + $0x60] sm:$0xff] %v924
        %941 = vst [vmem:[%s214 + $0x68] sm:$0xff] %v925
        %942 = vst [vmem:[%s214 + $0x70] sm:$0xff] %v926
        %943 = vst [vmem:[%s214 + $0x78] sm:$0xff] %v927
        %s944 = sand.u32 %s90, 1
        %s945 = sand.u32 %s90, 1
        %s946 = smul.addr %s945, 128
        %s947 = scalar_lea.vmem [#allocation3], %s946
        // Predicated region
        $region56: #{denoise_forward_feature_major.1} parent=50 // pred_check
          %p948 = pneg %p100
        $region57: #{denoise_forward_feature_major.1} parent=50 // pred_check_branch
          %950 = sbr.rel (%p948) target = $region59
        $region58: #{denoise_forward_feature_major.1} parent=50 // pred_region
          %s951 = smul.u32 4, %s14
          %s952 = smul.addr %s951, 8
          %s953 = scalar_lea.vmem %s3, %s952
          // Predicated region
          $region60: #{denoise_forward_feature_major.1} parent=58 // pred_check
            _
          $region61: #{denoise_forward_feature_major.1} parent=58 // pred_check_branch
            %955 = sbr.rel (0) target = $region63
          $region62: #{denoise_forward_feature_major.1} parent=58 // pred_region
            // Predicated region
            $region64: #{denoise_forward_feature_major.1} parent=62 // pred_check
              _
            $region65: #{denoise_forward_feature_major.1} parent=62 // pred_check_branch
              %957 = sbr.rel (0) target = $region67
            $region66: #{denoise_forward_feature_major.1} parent=62 // pred_region
              loop: start=0, step=1, limit=1
              $region68: #{denoise_forward_feature_major.1} parent=66 // loop_pre_header
                _
              $region69: #{denoise_forward_feature_major.1} parent=66 // loop_header
                %s959 = sphi 0, %s963
                %p960 = scmp.ge.s32.totalorder %s959, 1
                %s964 = sphi %s947, %s947
                %s965 = sphi %s953, %s953
              $region70: #{denoise_forward_feature_major.1} parent=66 // loop_header_branch
                %962 = sbr.rel (%p960) target = $region74
              $region71: #{denoise_forward_feature_major.1} parent=66 // loop_body
                %v966 = vld [vmem:[%s964] sm:$0xff]
                %967 = vst [vmem:[%s965] sm:$0xff] %v966
                %v968 = vld [vmem:[%s964 + $0x8] sm:$0xff]
                %969 = vst [vmem:[%s965 + $0x8] sm:$0xff] %v968
                %v970 = vld [vmem:[%s964 + $0x10] sm:$0xff]
                %971 = vst [vmem:[%s965 + $0x10] sm:$0xff] %v970
                %v972 = vld [vmem:[%s964 + $0x18] sm:$0xff]
                %973 = vst [vmem:[%s965 + $0x18] sm:$0xff] %v972
                %v974 = vld [vmem:[%s964 + $0x20] sm:$0xff]
                %975 = vst [vmem:[%s965 + $0x40] sm:$0xff] %v974
                %v976 = vld [vmem:[%s964 + $0x28] sm:$0xff]
                %977 = vst [vmem:[%s965 + $0x48] sm:$0xff] %v976
                %v978 = vld [vmem:[%s964 + $0x30] sm:$0xff]
                %979 = vst [vmem:[%s965 + $0x50] sm:$0xff] %v978
                %v980 = vld [vmem:[%s964 + $0x38] sm:$0xff]
                %981 = vst [vmem:[%s965 + $0x58] sm:$0xff] %v980
                %v982 = vld [vmem:[%s964 + $0x40] sm:$0xff]
                %983 = vst [vmem:[%s965 + $0x80] sm:$0xff] %v982
                %v984 = vld [vmem:[%s964 + $0x48] sm:$0xff]
                %985 = vst [vmem:[%s965 + $0x88] sm:$0xff] %v984
                %v986 = vld [vmem:[%s964 + $0x50] sm:$0xff]
                %987 = vst [vmem:[%s965 + $0x90] sm:$0xff] %v986
                %v988 = vld [vmem:[%s964 + $0x58] sm:$0xff]
                %989 = vst [vmem:[%s965 + $0x98] sm:$0xff] %v988
                %v990 = vld [vmem:[%s964 + $0x60] sm:$0xff]
                %991 = vst [vmem:[%s965 + $0xc0] sm:$0xff] %v990
                %v992 = vld [vmem:[%s964 + $0x68] sm:$0xff]
                %993 = vst [vmem:[%s965 + $0xc8] sm:$0xff] %v992
                %v994 = vld [vmem:[%s964 + $0x70] sm:$0xff]
                %995 = vst [vmem:[%s965 + $0xd0] sm:$0xff] %v994
                %v996 = vld [vmem:[%s964 + $0x78] sm:$0xff]
                %997 = vst [vmem:[%s965 + $0xd8] sm:$0xff] %v996
              $region72: #{denoise_forward_feature_major.1} parent=66 // loop_footer
                %s963 = sadd.s32 1, %s959
              $region73: #{denoise_forward_feature_major.1} parent=66 // loop_footer_branch
                %958 = sbr.rel target = $region69
              $region74: #{denoise_forward_feature_major.1} parent=66 // loop_exit
                _
            $region67: #{denoise_forward_feature_major.1} parent=62 // pred_fallthru
              _
            // Predicated region
            $region75: #{denoise_forward_feature_major.1} parent=62 // pred_check
              _
            $region76: #{denoise_forward_feature_major.1} parent=62 // pred_check_branch
              %999 = sbr.rel target = $region78
            $region77: #{denoise_forward_feature_major.1} parent=62 // pred_region
              _
            $region78: #{denoise_forward_feature_major.1} parent=62 // pred_fallthru
              _
          $region63: #{denoise_forward_feature_major.1} parent=58 // pred_fallthru
            _
          %1000 = vnop
        $region59: #{denoise_forward_feature_major.1} parent=50 // pred_fallthru
          _
      $region51: #{denoise_forward_feature_major.1} parent=5 // pred_fallthru
        _
      %p1001 = scmp.le.s32.totalorder 2, %s9
      // Predicated region
      $region79: #{denoise_forward_feature_major.1} parent=5 // pred_check
        %p1002 = pneg %p1001
      $region80: #{denoise_forward_feature_major.1} parent=5 // pred_check_branch
        %1004 = sbr.rel (%p1002) target = $region82
      $region81: #{denoise_forward_feature_major.1} parent=5 // pred_region
        %s1005 = ssub.s32 %s9, 2
        // Predicated region
        $region83: #{denoise_forward_feature_major.1} parent=81 // pred_check
          %p1006 = pneg %p106
        $region84: #{denoise_forward_feature_major.1} parent=81 // pred_check_branch
          %1008 = sbr.rel (%p1006) target = $region86
        $region85: #{denoise_forward_feature_major.1} parent=81 // pred_region
          %s1009 = sand.u32 %s91, 1
          %s1010 = sand.u32 %s91, 1
          %s1011 = smul.addr %s1010, 128
          %s1012 = scalar_lea.vmem [#allocation3], %s1011
        $region86: #{denoise_forward_feature_major.1} parent=81 // pred_fallthru
          _
      $region82: #{denoise_forward_feature_major.1} parent=5 // pred_fallthru
        _
    $region6: #{denoise_forward_feature_major.1} parent=1 // loop_footer
      %s13 = sadd.s32 1, %s9
    $region7: #{denoise_forward_feature_major.1} parent=1 // loop_footer_branch
      %8 = sbr.rel target = $region3
    $region8: #{denoise_forward_feature_major.1} parent=1 // loop_exit
      _

</llo_original>
